<compile_context>
chip_gen: v7x
topology: tpu7x:2x2x1
jax: 0.10.0
libtpu: 0.0.40
codegen_flags: <defaults>
</compile_context>

<pallas_src>
import jax
import jax.numpy as jnp
from jax.experimental import pallas as pl
from jax.experimental.pallas import tpu as pltpu

HIDDEN = 10
OUT = 8

# Per-column sigmoid scale / offset from BetaNet.forward.
_SCALE_VALS = (0.9, 0.1, 0.01, 0.05, 0.05, 0.05, 0.05, 0.01)
_OFFSET_VALS = (0.1, 0.01, 0.001, 0.001, 0.001, 0.001, 0.001, 0.001)


def _round_up(x, m):
    return (x + m - 1) // m * m


def _make_kernel(transpose_out):
    def kernel(t_ref, w1_ref, b1_ref, w2_ref, b2_ref, w3_ref, b3_ref,
               sh_ref, of_ref, o_ref):
        # Batch on the 128-lane axis, features on sublanes (lane-dense compute).
        t_row = t_ref[...]                                     # (1, TB)

        # Layer 1: Linear(1, H) + tanh.  K == 1 -> VPU broadcast outer product
        # (a K=1 matmul would waste an entire MXU pass).
        h1 = jnp.tanh(w1_ref[...] * t_row + b1_ref[...])       # (H,1)*(1,TB) -> (H, TB)

        # Layer 2: Linear(H, H) + tanh.  Lane-dense N = TB -> MXU is worthwhile.
        h2 = jnp.tanh(
            jnp.dot(w2_ref[...], h1, preferred_element_type=jnp.float32)
            + b2_ref[...])                                      # (H, TB)

        # Output layer folded with the sigmoid rescale:
        #   sigmoid(x)*s + c == tanh(x/2)*(s/2) + (c + s/2)
        # The 1/2 is already absorbed into w3_ref/b3_ref by the wrapper;
        # sh_ref = s/2 and of_ref = c + s/2, so only one EUP op (tanh) remains.
        y = jnp.tanh(
            jnp.dot(w3_ref[...], h2, preferred_element_type=jnp.float32)
            + b3_ref[...])                                      # (OUT, TB)
        out_om = y * sh_ref[...] + of_ref[...]                  # (OUT, TB), lane-dense

        if transpose_out:
            # In-kernel (OUT, TB) -> (TB, OUT) transpose (XLU; hidden under the
            # EUP-bound epilogue) so the HBM output is already batch-major and
            # the wrapper needs no extra transpose/slice pass over the output.
            o_ref[...] = jnp.transpose(out_om)
        else:
            o_ref[...] = out_om

    return kernel


def betanet_forward(t, w1, b1, w2, b2, w3, b3, *, block_b=2048):
    """t: (B, 1) float32 -> (B, 8) float32.  Weights stored as (in, out)."""
    B = t.shape[0]
    f32 = jnp.float32

    # Batch tile on the lane axis: multiple of 128, capped at ~half the
    # 128-rounded batch so there are >= 2 grid steps whenever possible
    # (both v7x TensorCores get work) and the lane-padded (tb, 8) output
    # block stays ~1 MiB per double-buffer.
    b128 = _round_up(max(B, 1), 128)
    tb = min(_round_up(block_b, 128), max(128, _round_up(pl.cdiv(b128, 2), 128)))
    n_blocks = pl.cdiv(B, tb)

    # (B, 1) -> (1, B) is a pure relabeling of the contiguous buffer (no copy).
    # The ragged tail (B not a multiple of tb) is handled by Pallas
    # partial-block masking -- no jnp.pad of the input, no output slice.
    t_row = t.astype(f32).reshape(1, -1)

    # (out, in)-major weights; biases / constants as (rows, 1) columns so they
    # sit on sublanes and lane-broadcast inside the kernel.
    w1c = w1.astype(f32).reshape(1, HIDDEN).T          # (H, 1)
    b1c = b1.astype(f32).reshape(HIDDEN, 1)            # (H, 1)
    w2t = w2.astype(f32).T                             # (H, H)
    b2c = b2.astype(f32).reshape(HIDDEN, 1)            # (H, 1)
    w3h = 0.5 * w3.astype(f32).T                       # (OUT, H), absorbs the tanh 1/2
    b3h = 0.5 * b3.astype(f32).reshape(OUT, 1)         # (OUT, 1)
    scale = jnp.asarray(_SCALE_VALS, f32).reshape(OUT, 1)
    offset = jnp.asarray(_OFFSET_VALS, f32).reshape(OUT, 1)
    sh = 0.5 * scale                                   # tanh multiplier
    of = offset + 0.5 * scale                          # shifted offset

    resident = lambda shape: pl.BlockSpec(shape, lambda i: (0, 0))  # stays in VMEM
    in_specs = [
        pl.BlockSpec((1, tb), lambda i: (0, i)),       # t tile (lane-dense)
        resident((HIDDEN, 1)),                         # w1^T
        resident((HIDDEN, 1)),                         # b1
        resident((HIDDEN, HIDDEN)),                    # w2^T
        resident((HIDDEN, 1)),                         # b2
        resident((OUT, HIDDEN)),                       # 0.5 * w3^T
        resident((OUT, 1)),                            # 0.5 * b3
        resident((OUT, 1)),                            # scale / 2
        resident((OUT, 1)),                            # offset + scale / 2
    ]
    args = (t_row, w1c, b1c, w2t, b2c, w3h, b3h, sh, of)

    def run(transpose_in_kernel):
        if transpose_in_kernel:
            out_shape = jax.ShapeDtypeStruct((B, OUT), f32)
            out_specs = pl.BlockSpec((tb, OUT), lambda i: (i, 0))
        else:
            out_shape = jax.ShapeDtypeStruct((OUT, B), f32)
            out_specs = pl.BlockSpec((OUT, tb), lambda i: (0, i))
        return pl.pallas_call(
            _make_kernel(transpose_in_kernel),
            out_shape=out_shape,
            grid_spec=pltpu.PrefetchScalarGridSpec(
                num_scalar_prefetch=0,
                grid=(n_blocks,),
                in_specs=in_specs,
                out_specs=out_specs,
            ),
            compiler_params=pltpu.CompilerParams(
                # Independent batch tiles -> shard across both v7x TensorCores.
                dimension_semantics=("parallel",),
            ),
        )(*args)

    try:
        return run(True)      # batch-major (B, 8) written straight from the kernel
    except Exception:
        # Safety net: if this Mosaic version rejects the standalone
        # (OUT, tb) -> (tb, OUT) relayout, fall back to the lane-dense (8, B)
        # output plus a single XLA transpose (correct, one extra HBM pass).
        return run(False).T


def init_params(key):
    """Deterministic Xavier-normal init with tanh gain (5/3), zero biases.
    Weights stored as (in_features, out_features)."""
    gain = 5.0 / 3.0
    k1, k2, k3 = jax.random.split(key, 3)

    def xavier(k, fan_in, fan_out):
        std = gain * (2.0 / (fan_in + fan_out)) ** 0.5
        return std * jax.random.normal(k, (fan_in, fan_out), jnp.float32)

    w1 = xavier(k1, 1, HIDDEN)
    b1 = jnp.zeros((HIDDEN,), jnp.float32)
    w2 = xavier(k2, HIDDEN, HIDDEN)
    b2 = jnp.zeros((HIDDEN,), jnp.float32)
    w3 = xavier(k3, HIDDEN, OUT)
    b3 = jnp.zeros((OUT,), jnp.float32)
    return w1, b1, w2, b2, w3, b3


if __name__ == "__main__":
    key = jax.random.PRNGKey(0)
    kp, kt = jax.random.split(key)
    w1, b1, w2, b2, w3, b3 = init_params(kp)

    B = 200  # deliberately not a multiple of 128: exercises the masked ragged tail
    t = jax.random.uniform(kt, (B, 1), jnp.float32)

    out = jax.block_until_ready(betanet_forward(t, w1, b1, w2, b2, w3, b3))

    # Pure-JAX reference (same math, outside Pallas; dropout = identity).
    h1 = jnp.tanh(t @ w1 + b1)
    h2 = jnp.tanh(h1 @ w2 + b2)
    params = h2 @ w3 + b3
    ref = (jax.nn.sigmoid(params) * jnp.asarray(_SCALE_VALS, jnp.float32)
           + jnp.asarray(_OFFSET_VALS, jnp.float32))

    assert out.shape == (B, OUT)
    assert jnp.allclose(out, ref, atol=1e-3), "mismatch vs reference"

    print("KERNEL_OK")
</pallas_src>

<mosaic_0001>
module attributes {stable_mosaic.version = 11 : i64} {
  func.func @kernel(%arg0: i32, %arg1: memref<1x128xf32, #tpu.memory_space<vmem>>, %arg2: memref<10x1xf32, #tpu.memory_space<vmem>>, %arg3: memref<10x1xf32, #tpu.memory_space<vmem>>, %arg4: memref<10x10xf32, #tpu.memory_space<vmem>>, %arg5: memref<10x1xf32, #tpu.memory_space<vmem>>, %arg6: memref<8x10xf32, #tpu.memory_space<vmem>>, %arg7: memref<8x1xf32, #tpu.memory_space<vmem>>, %arg8: memref<8x1xf32, #tpu.memory_space<vmem>>, %arg9: memref<8x1xf32, #tpu.memory_space<vmem>>, %arg10: memref<128x8xf32, #tpu.memory_space<vmem>>) attributes {dimension_semantics = [#tpu.dimension_semantics<parallel>], iteration_bounds = array<i64: 2>, scalar_prefetch = 0 : i64, scratch_operands = 0 : i64, tpu.core_type = #tpu.core_type<tc>, window_params = [{transform_indices = @transform_0, window_bounds = array<i64: 1, 128>}, {pipeline_mode = #tpu.pipeline_mode<synchronous>, transform_indices = @transform_1, window_bounds = array<i64: 10, 1>}, {pipeline_mode = #tpu.pipeline_mode<synchronous>, transform_indices = @transform_2, window_bounds = array<i64: 10, 1>}, {pipeline_mode = #tpu.pipeline_mode<synchronous>, transform_indices = @transform_3, window_bounds = array<i64: 10, 10>}, {pipeline_mode = #tpu.pipeline_mode<synchronous>, transform_indices = @transform_4, window_bounds = array<i64: 10, 1>}, {pipeline_mode = #tpu.pipeline_mode<synchronous>, transform_indices = @transform_5, window_bounds = array<i64: 8, 10>}, {pipeline_mode = #tpu.pipeline_mode<synchronous>, transform_indices = @transform_6, window_bounds = array<i64: 8, 1>}, {pipeline_mode = #tpu.pipeline_mode<synchronous>, transform_indices = @transform_7, window_bounds = array<i64: 8, 1>}, {pipeline_mode = #tpu.pipeline_mode<synchronous>, transform_indices = @transform_8, window_bounds = array<i64: 8, 1>}, {transform_indices = @transform_9, window_bounds = array<i64: 128, 8>}]} {
    %c0 = arith.constant 0 : index
    %c0_0 = arith.constant 0 : index
    %0 = vector.load %arg1[%c0, %c0_0] : memref<1x128xf32, #tpu.memory_space<vmem>>, vector<1x128xf32>
    %c0_1 = arith.constant 0 : index
    %c0_2 = arith.constant 0 : index
    %1 = vector.load %arg2[%c0_1, %c0_2] : memref<10x1xf32, #tpu.memory_space<vmem>>, vector<10x1xf32>
    %2 = vector.broadcast %1 : vector<10x1xf32> to vector<10x128xf32>
    %3 = vector.broadcast %0 : vector<1x128xf32> to vector<10x128xf32>
    %4 = arith.mulf %2, %3 : vector<10x128xf32>
    %c0_3 = arith.constant 0 : index
    %c0_4 = arith.constant 0 : index
    %5 = vector.load %arg3[%c0_3, %c0_4] : memref<10x1xf32, #tpu.memory_space<vmem>>, vector<10x1xf32>
    %6 = vector.broadcast %5 : vector<10x1xf32> to vector<10x128xf32>
    %7 = arith.addf %4, %6 : vector<10x128xf32>
    %8 = math.tanh %7 : vector<10x128xf32>
    %c0_5 = arith.constant 0 : index
    %c0_6 = arith.constant 0 : index
    %9 = vector.load %arg4[%c0_5, %c0_6] : memref<10x10xf32, #tpu.memory_space<vmem>>, vector<10x10xf32>
    %cst = arith.constant dense<0.000000e+00> : vector<10x128xf32>
    %10 = tpu.matmul %9, %8, %cst {dimension_numbers = #tpu.dot_dimension_numbers<[1], [0], [0], [1], [0, 0, 1, 1], [], []>} : vector<10x10xf32>, vector<10x128xf32>, vector<10x128xf32> -> vector<10x128xf32>
    %c0_7 = arith.constant 0 : index
    %c0_8 = arith.constant 0 : index
    %11 = vector.load %arg5[%c0_7, %c0_8] : memref<10x1xf32, #tpu.memory_space<vmem>>, vector<10x1xf32>
    %12 = vector.broadcast %11 : vector<10x1xf32> to vector<10x128xf32>
    %13 = arith.addf %10, %12 : vector<10x128xf32>
    %14 = math.tanh %13 : vector<10x128xf32>
    %c0_9 = arith.constant 0 : index
    %c0_10 = arith.constant 0 : index
    %15 = vector.load %arg6[%c0_9, %c0_10] : memref<8x10xf32, #tpu.memory_space<vmem>>, vector<8x10xf32>
    %cst_11 = arith.constant dense<0.000000e+00> : vector<8x128xf32>
    %16 = tpu.matmul %15, %14, %cst_11 {dimension_numbers = #tpu.dot_dimension_numbers<[1], [0], [0], [1], [0, 0, 1, 1], [], []>} : vector<8x10xf32>, vector<10x128xf32>, vector<8x128xf32> -> vector<8x128xf32>
    %c0_12 = arith.constant 0 : index
    %c0_13 = arith.constant 0 : index
    %17 = vector.load %arg7[%c0_12, %c0_13] : memref<8x1xf32, #tpu.memory_space<vmem>>, vector<8x1xf32>
    %18 = vector.broadcast %17 : vector<8x1xf32> to vector<8x128xf32>
    %19 = arith.addf %16, %18 : vector<8x128xf32>
    %20 = math.tanh %19 : vector<8x128xf32>
    %c0_14 = arith.constant 0 : index
    %c0_15 = arith.constant 0 : index
    %21 = vector.load %arg8[%c0_14, %c0_15] : memref<8x1xf32, #tpu.memory_space<vmem>>, vector<8x1xf32>
    %22 = vector.broadcast %21 : vector<8x1xf32> to vector<8x128xf32>
    %23 = arith.mulf %20, %22 : vector<8x128xf32>
    %c0_16 = arith.constant 0 : index
    %c0_17 = arith.constant 0 : index
    %24 = vector.load %arg9[%c0_16, %c0_17] : memref<8x1xf32, #tpu.memory_space<vmem>>, vector<8x1xf32>
    %25 = vector.broadcast %24 : vector<8x1xf32> to vector<8x128xf32>
    %26 = arith.addf %23, %25 : vector<8x128xf32>
    %27 = tpu.transpose %26, [1, 0] : vector<8x128xf32> -> vector<128x8xf32>
    %c0_18 = arith.constant 0 : index
    %c0_19 = arith.constant 0 : index
    %28 = vector.load %arg10[%c0_18, %c0_19] : memref<128x8xf32, #tpu.memory_space<vmem>>, vector<128x8xf32>
    tpu.vector_store %arg10[%c0_18, %c0_19], %27 {strides = array<i32>} : memref<128x8xf32, #tpu.memory_space<vmem>>, vector<128x8xf32>,
    return
  }
  func.func @transform_0(%arg0: i32) -> (i32, i32) {
    %c0_i32 = arith.constant 0 : i32
    %c0_i32_0 = arith.constant 0 : i32
    return %c0_i32, %arg0 : i32, i32
  }
  func.func @transform_1(%arg0: i32) -> (i32, i32) {
    %c0_i32 = arith.constant 0 : i32
    %c0_i32_0 = arith.constant 0 : i32
    %c0_i32_1 = arith.constant 0 : i32
    return %c0_i32, %c0_i32_0 : i32, i32
  }
  func.func @transform_2(%arg0: i32) -> (i32, i32) {
    %c0_i32 = arith.constant 0 : i32
    %c0_i32_0 = arith.constant 0 : i32
    %c0_i32_1 = arith.constant 0 : i32
    return %c0_i32, %c0_i32_0 : i32, i32
  }
  func.func @transform_3(%arg0: i32) -> (i32, i32) {
    %c0_i32 = arith.constant 0 : i32
    %c0_i32_0 = arith.constant 0 : i32
    %c0_i32_1 = arith.constant 0 : i32
    return %c0_i32, %c0_i32_0 : i32, i32
  }
  func.func @transform_4(%arg0: i32) -> (i32, i32) {
    %c0_i32 = arith.constant 0 : i32
    %c0_i32_0 = arith.constant 0 : i32
    %c0_i32_1 = arith.constant 0 : i32
    return %c0_i32, %c0_i32_0 : i32, i32
  }
  func.func @transform_5(%arg0: i32) -> (i32, i32) {
    %c0_i32 = arith.constant 0 : i32
    %c0_i32_0 = arith.constant 0 : i32
    %c0_i32_1 = arith.constant 0 : i32
    return %c0_i32, %c0_i32_0 : i32, i32
  }
  func.func @transform_6(%arg0: i32) -> (i32, i32) {
    %c0_i32 = arith.constant 0 : i32
    %c0_i32_0 = arith.constant 0 : i32
    %c0_i32_1 = arith.constant 0 : i32
    return %c0_i32, %c0_i32_0 : i32, i32
  }
  func.func @transform_7(%arg0: i32) -> (i32, i32) {
    %c0_i32 = arith.constant 0 : i32
    %c0_i32_0 = arith.constant 0 : i32
    %c0_i32_1 = arith.constant 0 : i32
    return %c0_i32, %c0_i32_0 : i32, i32
  }
  func.func @transform_8(%arg0: i32) -> (i32, i32) {
    %c0_i32 = arith.constant 0 : i32
    %c0_i32_0 = arith.constant 0 : i32
    %c0_i32_1 = arith.constant 0 : i32
    return %c0_i32, %c0_i32_0 : i32, i32
  }
  func.func @transform_9(%arg0: i32) -> (i32, i32) {
    %c0_i32 = arith.constant 0 : i32
    %c0_i32_0 = arith.constant 0 : i32
    return %arg0, %c0_i32 : i32, i32
  }
}

module attributes {stable_mosaic.version = 11 : i64} {
  func.func @kernel(%arg0: i32, %arg1: memref<1x128xf32, #tpu.memory_space<vmem>>, %arg2: memref<10x1xf32, #tpu.memory_space<vmem>>, %arg3: memref<10x1xf32, #tpu.memory_space<vmem>>, %arg4: memref<10x10xf32, #tpu.memory_space<vmem>>, %arg5: memref<10x1xf32, #tpu.memory_space<vmem>>, %arg6: memref<8x10xf32, #tpu.memory_space<vmem>>, %arg7: memref<8x1xf32, #tpu.memory_space<vmem>>, %arg8: memref<8x1xf32, #tpu.memory_space<vmem>>, %arg9: memref<8x1xf32, #tpu.memory_space<vmem>>, %arg10: memref<8x128xf32, #tpu.memory_space<vmem>>) attributes {dimension_semantics = [#tpu.dimension_semantics<parallel>], iteration_bounds = array<i64: 2>, scalar_prefetch = 0 : i64, scratch_operands = 0 : i64, tpu.core_type = #tpu.core_type<tc>, window_params = [{transform_indices = @transform_0, window_bounds = array<i64: 1, 128>}, {pipeline_mode = #tpu.pipeline_mode<synchronous>, transform_indices = @transform_1, window_bounds = array<i64: 10, 1>}, {pipeline_mode = #tpu.pipeline_mode<synchronous>, transform_indices = @transform_2, window_bounds = array<i64: 10, 1>}, {pipeline_mode = #tpu.pipeline_mode<synchronous>, transform_indices = @transform_3, window_bounds = array<i64: 10, 10>}, {pipeline_mode = #tpu.pipeline_mode<synchronous>, transform_indices = @transform_4, window_bounds = array<i64: 10, 1>}, {pipeline_mode = #tpu.pipeline_mode<synchronous>, transform_indices = @transform_5, window_bounds = array<i64: 8, 10>}, {pipeline_mode = #tpu.pipeline_mode<synchronous>, transform_indices = @transform_6, window_bounds = array<i64: 8, 1>}, {pipeline_mode = #tpu.pipeline_mode<synchronous>, transform_indices = @transform_7, window_bounds = array<i64: 8, 1>}, {pipeline_mode = #tpu.pipeline_mode<synchronous>, transform_indices = @transform_8, window_bounds = array<i64: 8, 1>}, {transform_indices = @transform_9, window_bounds = array<i64: 8, 128>}]} {
    %c0 = arith.constant 0 : index
    %c0_0 = arith.constant 0 : index
    %0 = vector.load %arg1[%c0, %c0_0] : memref<1x128xf32, #tpu.memory_space<vmem>>, vector<1x128xf32>
    %c0_1 = arith.constant 0 : index
    %c0_2 = arith.constant 0 : index
    %1 = vector.load %arg2[%c0_1, %c0_2] : memref<10x1xf32, #tpu.memory_space<vmem>>, vector<10x1xf32>
    %2 = vector.broadcast %1 : vector<10x1xf32> to vector<10x128xf32>
    %3 = vector.broadcast %0 : vector<1x128xf32> to vector<10x128xf32>
    %4 = arith.mulf %2, %3 : vector<10x128xf32>
    %c0_3 = arith.constant 0 : index
    %c0_4 = arith.constant 0 : index
    %5 = vector.load %arg3[%c0_3, %c0_4] : memref<10x1xf32, #tpu.memory_space<vmem>>, vector<10x1xf32>
    %6 = vector.broadcast %5 : vector<10x1xf32> to vector<10x128xf32>
    %7 = arith.addf %4, %6 : vector<10x128xf32>
    %8 = math.tanh %7 : vector<10x128xf32>
    %c0_5 = arith.constant 0 : index
    %c0_6 = arith.constant 0 : index
    %9 = vector.load %arg4[%c0_5, %c0_6] : memref<10x10xf32, #tpu.memory_space<vmem>>, vector<10x10xf32>
    %cst = arith.constant dense<0.000000e+00> : vector<10x128xf32>
    %10 = tpu.matmul %9, %8, %cst {dimension_numbers = #tpu.dot_dimension_numbers<[1], [0], [0], [1], [0, 0, 1, 1], [], []>} : vector<10x10xf32>, vector<10x128xf32>, vector<10x128xf32> -> vector<10x128xf32>
    %c0_7 = arith.constant 0 : index
    %c0_8 = arith.constant 0 : index
    %11 = vector.load %arg5[%c0_7, %c0_8] : memref<10x1xf32, #tpu.memory_space<vmem>>, vector<10x1xf32>
    %12 = vector.broadcast %11 : vector<10x1xf32> to vector<10x128xf32>
    %13 = arith.addf %10, %12 : vector<10x128xf32>
    %14 = math.tanh %13 : vector<10x128xf32>
    %c0_9 = arith.constant 0 : index
    %c0_10 = arith.constant 0 : index
    %15 = vector.load %arg6[%c0_9, %c0_10] : memref<8x10xf32, #tpu.memory_space<vmem>>, vector<8x10xf32>
    %cst_11 = arith.constant dense<0.000000e+00> : vector<8x128xf32>
    %16 = tpu.matmul %15, %14, %cst_11 {dimension_numbers = #tpu.dot_dimension_numbers<[1], [0], [0], [1], [0, 0, 1, 1], [], []>} : vector<8x10xf32>, vector<10x128xf32>, vector<8x128xf32> -> vector<8x128xf32>
    %c0_12 = arith.constant 0 : index
    %c0_13 = arith.constant 0 : index
    %17 = vector.load %arg7[%c0_12, %c0_13] : memref<8x1xf32, #tpu.memory_space<vmem>>, vector<8x1xf32>
    %18 = vector.broadcast %17 : vector<8x1xf32> to vector<8x128xf32>
    %19 = arith.addf %16, %18 : vector<8x128xf32>
    %20 = math.tanh %19 : vector<8x128xf32>
    %c0_14 = arith.constant 0 : index
    %c0_15 = arith.constant 0 : index
    %21 = vector.load %arg8[%c0_14, %c0_15] : memref<8x1xf32, #tpu.memory_space<vmem>>, vector<8x1xf32>
    %22 = vector.broadcast %21 : vector<8x1xf32> to vector<8x128xf32>
    %23 = arith.mulf %20, %22 : vector<8x128xf32>
    %c0_16 = arith.constant 0 : index
    %c0_17 = arith.constant 0 : index
    %24 = vector.load %arg9[%c0_16, %c0_17] : memref<8x1xf32, #tpu.memory_space<vmem>>, vector<8x1xf32>
    %25 = vector.broadcast %24 : vector<8x1xf32> to vector<8x128xf32>
    %26 = arith.addf %23, %25 : vector<8x128xf32>
    %c0_18 = arith.constant 0 : index
    %c0_19 = arith.constant 0 : index
    %27 = vector.load %arg10[%c0_18, %c0_19] : memref<8x128xf32, #tpu.memory_space<vmem>>, vector<8x128xf32>
    tpu.vector_store %arg10[%c0_18, %c0_19], %26 {strides = array<i32>} : memref<8x128xf32, #tpu.memory_space<vmem>>, vector<8x128xf32>,
    return
  }
  func.func @transform_0(%arg0: i32) -> (i32, i32) {
    %c0_i32 = arith.constant 0 : i32
    %c0_i32_0 = arith.constant 0 : i32
    return %c0_i32, %arg0 : i32, i32
  }
  func.func @transform_1(%arg0: i32) -> (i32, i32) {
    %c0_i32 = arith.constant 0 : i32
    %c0_i32_0 = arith.constant 0 : i32
    %c0_i32_1 = arith.constant 0 : i32
    return %c0_i32, %c0_i32_0 : i32, i32
  }
  func.func @transform_2(%arg0: i32) -> (i32, i32) {
    %c0_i32 = arith.constant 0 : i32
    %c0_i32_0 = arith.constant 0 : i32
    %c0_i32_1 = arith.constant 0 : i32
    return %c0_i32, %c0_i32_0 : i32, i32
  }
  func.func @transform_3(%arg0: i32) -> (i32, i32) {
    %c0_i32 = arith.constant 0 : i32
    %c0_i32_0 = arith.constant 0 : i32
    %c0_i32_1 = arith.constant 0 : i32
    return %c0_i32, %c0_i32_0 : i32, i32
  }
  func.func @transform_4(%arg0: i32) -> (i32, i32) {
    %c0_i32 = arith.constant 0 : i32
    %c0_i32_0 = arith.constant 0 : i32
    %c0_i32_1 = arith.constant 0 : i32
    return %c0_i32, %c0_i32_0 : i32, i32
  }
  func.func @transform_5(%arg0: i32) -> (i32, i32) {
    %c0_i32 = arith.constant 0 : i32
    %c0_i32_0 = arith.constant 0 : i32
    %c0_i32_1 = arith.constant 0 : i32
    return %c0_i32, %c0_i32_0 : i32, i32
  }
  func.func @transform_6(%arg0: i32) -> (i32, i32) {
    %c0_i32 = arith.constant 0 : i32
    %c0_i32_0 = arith.constant 0 : i32
    %c0_i32_1 = arith.constant 0 : i32
    return %c0_i32, %c0_i32_0 : i32, i32
  }
  func.func @transform_7(%arg0: i32) -> (i32, i32) {
    %c0_i32 = arith.constant 0 : i32
    %c0_i32_0 = arith.constant 0 : i32
    %c0_i32_1 = arith.constant 0 : i32
    return %c0_i32, %c0_i32_0 : i32, i32
  }
  func.func @transform_8(%arg0: i32) -> (i32, i32) {
    %c0_i32 = arith.constant 0 : i32
    %c0_i32_0 = arith.constant 0 : i32
    %c0_i32_1 = arith.constant 0 : i32
    return %c0_i32, %c0_i32_0 : i32, i32
  }
  func.func @transform_9(%arg0: i32) -> (i32, i32) {
    %c0_i32 = arith.constant 0 : i32
    %c0_i32_0 = arith.constant 0 : i32
    return %c0_i32, %arg0 : i32, i32
  }
}

</mosaic_0001>

<llo_original>
// kernel: tpu_custom_call.1
$region0: #{tpu_custom_call.1}
  #allocation0 [shape = 'u32[]', space=smem, size = 0x4, offset = 0x4, fixed_abs, tag = 'smem constant byte address 0x4 - core index']
  #allocation1 [shape = 'u32[144,128]{1,0:T(1,128)}', space=vmem, size = 0x12000, scoped, tag = 'internal scratch']
  %s0 = inlined_call_operand.vmem [shape: f32[1,200], index: 0, kind: input, shape index: {}]
  %s1 = inlined_call_operand.vmem [shape: f32[10,1], index: 1, kind: input, shape index: {}]
  %s2 = inlined_call_operand.vmem [shape: f32[10,1], index: 2, kind: input, shape index: {}]
  %s3 = inlined_call_operand.vmem [shape: f32[10,10], index: 3, kind: input, shape index: {}]
  %s4 = inlined_call_operand.vmem [shape: f32[10,1], index: 4, kind: input, shape index: {}]
  %s5 = inlined_call_operand.vmem [shape: f32[8,10], index: 5, kind: input, shape index: {}]
  %s6 = inlined_call_operand.vmem [shape: f32[8,1], index: 6, kind: input, shape index: {}]
  %s7 = inlined_call_operand.vmem [shape: f32[8,1], index: 7, kind: input, shape index: {}]
  %s8 = inlined_call_operand.vmem [shape: f32[8,1], index: 8, kind: input, shape index: {}]
  %s9 = inlined_call_operand.vmem [shape: f32[200,8], index: 9, kind: output, shape index: {}]
  %s10 = sld [smem:[#allocation0]]
  $region117: #{tpu_custom_call.1} parent=0
    _
  %s12 = ssub.s32 1, %s10
  %s13 = scalar_select 0, %s12, %s10
  $region1: #{tpu_custom_call.1} parent=0
    #allocation2 [shape = 'u8[131072]{0}', space=vmem, size = 0x20000, scoped, tag = 'output window, operand 0']
    loop: start=0, step=1, limit=4
    $region2: #{tpu_custom_call.1} parent=1 // loop_pre_header
      _
    $region3: #{tpu_custom_call.1} parent=1 // loop_header
      %s15 = sphi 0, %s19
      %p16 = scmp.ge.s32.totalorder %s15, 4
      %s25 = sphi 0, %s27
      %s28 = sphi 0, %s25
      %s29 = sphi 0, %s28
      %s45 = sphi 0, %s29
      %s49 = sphi 0, %s49
      %s51 = sphi 0, %s49
      %s52 = sphi 0, %s51
      %s66 = sphi 0, %s52
      %s70 = sphi 0, %s70
      %s72 = sphi 0, %s70
      %s73 = sphi 0, %s72
      %s87 = sphi 0, %s73
      %s91 = sphi 0, %s91
      %s93 = sphi 0, %s91
      %s94 = sphi 0, %s93
      %s108 = sphi 0, %s94
      %s112 = sphi 0, %s112
      %s114 = sphi 0, %s112
      %s115 = sphi 0, %s114
      %s129 = sphi 0, %s115
      %s133 = sphi 0, %s133
      %s135 = sphi 0, %s133
      %s136 = sphi 0, %s135
      %s150 = sphi 0, %s136
      %s154 = sphi 0, %s154
      %s156 = sphi 0, %s154
      %s157 = sphi 0, %s156
      %s171 = sphi 0, %s157
      %s175 = sphi 0, %s175
      %s177 = sphi 0, %s175
      %s178 = sphi 0, %s177
      %s192 = sphi 0, %s178
      %s196 = sphi 0, %s196
      %s198 = sphi 0, %s196
      %s199 = sphi 0, %s198
      %s213 = sphi 0, %s199
      %s219 = sphi 0, %s221
      %s222 = sphi 0, %s219
      %s223 = sphi 0, %s222
      %s239 = sphi 0, %s223
    $region4: #{tpu_custom_call.1} parent=1 // loop_header_branch
      %18 = sbr.rel (%p16) target = $region8
    $region5: #{tpu_custom_call.1} parent=1 // loop_body
      %s20 = ssub.s32 %s15, 1
      %s21 = ssub.s32 %s15, 2
      %s22 = sadd.s32 %s15, 1
      %s23 = ssub.s32 %s15, %s22
      %p24 = scmp.eq.s32.totalorder %s23, 0
      %s26 = sadd.s32 %s25, 1
      %s27 = scalar_select %p24, %s25, %s26
      %p30 = pneg %p24
      %p31 = scmp.eq.s32.totalorder %s15, 1
      %p32 = por %p30, %p31
      %p33 = scmp.ne.s32.totalorder %s25, %s28
      %p34 = scmp.eq.s32.totalorder %s15, 0
      %p35 = por %p33, %p34
      %p36 = scmp.ne.s32.totalorder %s25, %s28
      %p37 = scmp.eq.s32.totalorder %s20, 1
      %p38 = por %p36, %p37
      %p39 = scmp.ne.s32.totalorder %s28, %s29
      %p40 = scmp.eq.s32.totalorder %s20, 0
      %p41 = por %p39, %p40
      %p42 = scmp.ne.s32.totalorder %s28, %s29
      %p43 = scmp.eq.s32.totalorder %s21, 1
      %p44 = por %p42, %p43
      %p46 = scmp.ne.s32.totalorder %s29, %s45
      %p47 = scmp.eq.s32.totalorder %s21, 0
      %p48 = por %p46, %p47
      %s50 = sadd.s32 %s49, 1
      %p53 = scmp.eq.s32.totalorder %s15, 1
      %p54 = scmp.ne.s32.totalorder %s49, %s51
      %p55 = scmp.eq.s32.totalorder %s15, 0
      %p56 = por %p54, %p55
      %p57 = scmp.ne.s32.totalorder %s49, %s51
      %p58 = scmp.eq.s32.totalorder %s20, 1
      %p59 = por %p57, %p58
      %p60 = scmp.ne.s32.totalorder %s51, %s52
      %p61 = scmp.eq.s32.totalorder %s20, 0
      %p62 = por %p60, %p61
      %p63 = scmp.ne.s32.totalorder %s51, %s52
      %p64 = scmp.eq.s32.totalorder %s21, 1
      %p65 = por %p63, %p64
      %p67 = scmp.ne.s32.totalorder %s52, %s66
      %p68 = scmp.eq.s32.totalorder %s21, 0
      %p69 = por %p67, %p68
      %s71 = sadd.s32 %s70, 1
      %p74 = scmp.eq.s32.totalorder %s15, 1
      %p75 = scmp.ne.s32.totalorder %s70, %s72
      %p76 = scmp.eq.s32.totalorder %s15, 0
      %p77 = por %p75, %p76
      %p78 = scmp.ne.s32.totalorder %s70, %s72
      %p79 = scmp.eq.s32.totalorder %s20, 1
      %p80 = por %p78, %p79
      %p81 = scmp.ne.s32.totalorder %s72, %s73
      %p82 = scmp.eq.s32.totalorder %s20, 0
      %p83 = por %p81, %p82
      %p84 = scmp.ne.s32.totalorder %s72, %s73
      %p85 = scmp.eq.s32.totalorder %s21, 1
      %p86 = por %p84, %p85
      %p88 = scmp.ne.s32.totalorder %s73, %s87
      %p89 = scmp.eq.s32.totalorder %s21, 0
      %p90 = por %p88, %p89
      %s92 = sadd.s32 %s91, 1
      %p95 = scmp.eq.s32.totalorder %s15, 1
      %p96 = scmp.ne.s32.totalorder %s91, %s93
      %p97 = scmp.eq.s32.totalorder %s15, 0
      %p98 = por %p96, %p97
      %p99 = scmp.ne.s32.totalorder %s91, %s93
      %p100 = scmp.eq.s32.totalorder %s20, 1
      %p101 = por %p99, %p100
      %p102 = scmp.ne.s32.totalorder %s93, %s94
      %p103 = scmp.eq.s32.totalorder %s20, 0
      %p104 = por %p102, %p103
      %p105 = scmp.ne.s32.totalorder %s93, %s94
      %p106 = scmp.eq.s32.totalorder %s21, 1
      %p107 = por %p105, %p106
      %p109 = scmp.ne.s32.totalorder %s94, %s108
      %p110 = scmp.eq.s32.totalorder %s21, 0
      %p111 = por %p109, %p110
      %s113 = sadd.s32 %s112, 1
      %p116 = scmp.eq.s32.totalorder %s15, 1
      %p117 = scmp.ne.s32.totalorder %s112, %s114
      %p118 = scmp.eq.s32.totalorder %s15, 0
      %p119 = por %p117, %p118
      %p120 = scmp.ne.s32.totalorder %s112, %s114
      %p121 = scmp.eq.s32.totalorder %s20, 1
      %p122 = por %p120, %p121
      %p123 = scmp.ne.s32.totalorder %s114, %s115
      %p124 = scmp.eq.s32.totalorder %s20, 0
      %p125 = por %p123, %p124
      %p126 = scmp.ne.s32.totalorder %s114, %s115
      %p127 = scmp.eq.s32.totalorder %s21, 1
      %p128 = por %p126, %p127
      %p130 = scmp.ne.s32.totalorder %s115, %s129
      %p131 = scmp.eq.s32.totalorder %s21, 0
      %p132 = por %p130, %p131
      %s134 = sadd.s32 %s133, 1
      %p137 = scmp.eq.s32.totalorder %s15, 1
      %p138 = scmp.ne.s32.totalorder %s133, %s135
      %p139 = scmp.eq.s32.totalorder %s15, 0
      %p140 = por %p138, %p139
      %p141 = scmp.ne.s32.totalorder %s133, %s135
      %p142 = scmp.eq.s32.totalorder %s20, 1
      %p143 = por %p141, %p142
      %p144 = scmp.ne.s32.totalorder %s135, %s136
      %p145 = scmp.eq.s32.totalorder %s20, 0
      %p146 = por %p144, %p145
      %p147 = scmp.ne.s32.totalorder %s135, %s136
      %p148 = scmp.eq.s32.totalorder %s21, 1
      %p149 = por %p147, %p148
      %p151 = scmp.ne.s32.totalorder %s136, %s150
      %p152 = scmp.eq.s32.totalorder %s21, 0
      %p153 = por %p151, %p152
      %s155 = sadd.s32 %s154, 1
      %p158 = scmp.eq.s32.totalorder %s15, 1
      %p159 = scmp.ne.s32.totalorder %s154, %s156
      %p160 = scmp.eq.s32.totalorder %s15, 0
      %p161 = por %p159, %p160
      %p162 = scmp.ne.s32.totalorder %s154, %s156
      %p163 = scmp.eq.s32.totalorder %s20, 1
      %p164 = por %p162, %p163
      %p165 = scmp.ne.s32.totalorder %s156, %s157
      %p166 = scmp.eq.s32.totalorder %s20, 0
      %p167 = por %p165, %p166
      %p168 = scmp.ne.s32.totalorder %s156, %s157
      %p169 = scmp.eq.s32.totalorder %s21, 1
      %p170 = por %p168, %p169
      %p172 = scmp.ne.s32.totalorder %s157, %s171
      %p173 = scmp.eq.s32.totalorder %s21, 0
      %p174 = por %p172, %p173
      %s176 = sadd.s32 %s175, 1
      %p179 = scmp.eq.s32.totalorder %s15, 1
      %p180 = scmp.ne.s32.totalorder %s175, %s177
      %p181 = scmp.eq.s32.totalorder %s15, 0
      %p182 = por %p180, %p181
      %p183 = scmp.ne.s32.totalorder %s175, %s177
      %p184 = scmp.eq.s32.totalorder %s20, 1
      %p185 = por %p183, %p184
      %p186 = scmp.ne.s32.totalorder %s177, %s178
      %p187 = scmp.eq.s32.totalorder %s20, 0
      %p188 = por %p186, %p187
      %p189 = scmp.ne.s32.totalorder %s177, %s178
      %p190 = scmp.eq.s32.totalorder %s21, 1
      %p191 = por %p189, %p190
      %p193 = scmp.ne.s32.totalorder %s178, %s192
      %p194 = scmp.eq.s32.totalorder %s21, 0
      %p195 = por %p193, %p194
      %s197 = sadd.s32 %s196, 1
      %p200 = scmp.eq.s32.totalorder %s15, 1
      %p201 = scmp.ne.s32.totalorder %s196, %s198
      %p202 = scmp.eq.s32.totalorder %s15, 0
      %p203 = por %p201, %p202
      %p204 = scmp.ne.s32.totalorder %s196, %s198
      %p205 = scmp.eq.s32.totalorder %s20, 1
      %p206 = por %p204, %p205
      %p207 = scmp.ne.s32.totalorder %s198, %s199
      %p208 = scmp.eq.s32.totalorder %s20, 0
      %p209 = por %p207, %p208
      %p210 = scmp.ne.s32.totalorder %s198, %s199
      %p211 = scmp.eq.s32.totalorder %s21, 1
      %p212 = por %p210, %p211
      %p214 = scmp.ne.s32.totalorder %s199, %s213
      %p215 = scmp.eq.s32.totalorder %s21, 0
      %p216 = por %p214, %p215
      %s217 = ssub.s32 %s15, %s22
      %p218 = scmp.eq.s32.totalorder %s217, 0
      %s220 = sadd.s32 %s219, 1
      %s221 = scalar_select %p218, %s219, %s220
      %p224 = pneg %p218
      %p225 = scmp.eq.s32.totalorder %s15, 1
      %p226 = por %p224, %p225
      %p227 = scmp.ne.s32.totalorder %s219, %s222
      %p228 = scmp.eq.s32.totalorder %s15, 0
      %p229 = por %p227, %p228
      %p230 = scmp.ne.s32.totalorder %s219, %s222
      %p231 = scmp.eq.s32.totalorder %s20, 1
      %p232 = por %p230, %p231
      %p233 = scmp.ne.s32.totalorder %s222, %s223
      %p234 = scmp.eq.s32.totalorder %s20, 0
      %p235 = por %p233, %p234
      %p236 = scmp.ne.s32.totalorder %s222, %s223
      %p237 = scmp.eq.s32.totalorder %s21, 1
      %p238 = por %p236, %p237
      %p240 = scmp.ne.s32.totalorder %s223, %s239
      %p241 = scmp.eq.s32.totalorder %s21, 0
      %p242 = por %p240, %p241
      %p243 = scmp.le.s32.totalorder 1, %s15
      %p244 = scmp.lt.s32.totalorder %s15, 3
      %p245 = pnand %p243, %p244
      %p246 = pneg %p245
      // Predicated region
      $region9: #{tpu_custom_call.1} parent=5 // pred_check
        _
      $region10: #{tpu_custom_call.1} parent=5 // pred_check_branch
        %248 = sbr.rel (%p245) target = $region12
      $region11: #{tpu_custom_call.1} parent=5 // pred_region
        %s249 = ssub.s32 %s15, 1
        // Predicated region
        $region13: #{tpu_custom_call.1} parent=11 // pred_check
          %p250 = pneg %p62
        $region14: #{tpu_custom_call.1} parent=11 // pred_check_branch
          %252 = sbr.rel (%p250) target = $region16
        $region15: #{tpu_custom_call.1} parent=11 // pred_region
          _
        $region16: #{tpu_custom_call.1} parent=11 // pred_fallthru
          _
        // Predicated region
        $region17: #{tpu_custom_call.1} parent=11 // pred_check
          %p253 = pneg %p83
        $region18: #{tpu_custom_call.1} parent=11 // pred_check_branch
          %255 = sbr.rel (%p253) target = $region20
        $region19: #{tpu_custom_call.1} parent=11 // pred_region
          _
        $region20: #{tpu_custom_call.1} parent=11 // pred_fallthru
          _
        // Predicated region
        $region21: #{tpu_custom_call.1} parent=11 // pred_check
          %p256 = pneg %p104
        $region22: #{tpu_custom_call.1} parent=11 // pred_check_branch
          %258 = sbr.rel (%p256) target = $region24
        $region23: #{tpu_custom_call.1} parent=11 // pred_region
          _
        $region24: #{tpu_custom_call.1} parent=11 // pred_fallthru
          _
        // Predicated region
        $region25: #{tpu_custom_call.1} parent=11 // pred_check
          %p259 = pneg %p125
        $region26: #{tpu_custom_call.1} parent=11 // pred_check_branch
          %261 = sbr.rel (%p259) target = $region28
        $region27: #{tpu_custom_call.1} parent=11 // pred_region
          _
        $region28: #{tpu_custom_call.1} parent=11 // pred_fallthru
          _
        // Predicated region
        $region29: #{tpu_custom_call.1} parent=11 // pred_check
          %p262 = pneg %p146
        $region30: #{tpu_custom_call.1} parent=11 // pred_check_branch
          %264 = sbr.rel (%p262) target = $region32
        $region31: #{tpu_custom_call.1} parent=11 // pred_region
          _
        $region32: #{tpu_custom_call.1} parent=11 // pred_fallthru
          _
        // Predicated region
        $region33: #{tpu_custom_call.1} parent=11 // pred_check
          %p265 = pneg %p167
        $region34: #{tpu_custom_call.1} parent=11 // pred_check_branch
          %267 = sbr.rel (%p265) target = $region36
        $region35: #{tpu_custom_call.1} parent=11 // pred_region
          _
        $region36: #{tpu_custom_call.1} parent=11 // pred_fallthru
          _
        // Predicated region
        $region37: #{tpu_custom_call.1} parent=11 // pred_check
          %p268 = pneg %p188
        $region38: #{tpu_custom_call.1} parent=11 // pred_check_branch
          %270 = sbr.rel (%p268) target = $region40
        $region39: #{tpu_custom_call.1} parent=11 // pred_region
          _
        $region40: #{tpu_custom_call.1} parent=11 // pred_fallthru
          _
        // Predicated region
        $region41: #{tpu_custom_call.1} parent=11 // pred_check
          %p271 = pneg %p209
        $region42: #{tpu_custom_call.1} parent=11 // pred_check_branch
          %273 = sbr.rel (%p271) target = $region44
        $region43: #{tpu_custom_call.1} parent=11 // pred_region
          _
        $region44: #{tpu_custom_call.1} parent=11 // pred_fallthru
          _
      $region12: #{tpu_custom_call.1} parent=5 // pred_fallthru
        _
      %p274 = scmp.lt.s32.totalorder %s15, 2
      // Predicated region
      $region45: #{tpu_custom_call.1} parent=5 // pred_check
        %p275 = pneg %p274
      $region46: #{tpu_custom_call.1} parent=5 // pred_check_branch
        %277 = sbr.rel (%p275) target = $region48
      $region47: #{tpu_custom_call.1} parent=5 // pred_region
        // Predicated region
        $region49: #{tpu_custom_call.1} parent=47 // pred_check
          %p278 = pneg %p35
        $region50: #{tpu_custom_call.1} parent=47 // pred_check_branch
          %280 = sbr.rel (%p278) target = $region52
        $region51: #{tpu_custom_call.1} parent=47 // pred_region
          %p281 = scmp.lt.s32.totalorder %s15, 1
          %s282 = scalar_select %p281, %s15, 1
          %s283 = scalar_lea.vmem %s0, %s282
        $region52: #{tpu_custom_call.1} parent=47 // pred_fallthru
          _
      $region48: #{tpu_custom_call.1} parent=5 // pred_fallthru
        _
      %p284 = scmp.le.s32.totalorder 1, %s15
      %p285 = scmp.lt.s32.totalorder %s15, 3
      %p286 = pnand %p284, %p285
      %p287 = pneg %p286
      // Predicated region
      $region53: #{tpu_custom_call.1} parent=5 // pred_check
        _
      $region54: #{tpu_custom_call.1} parent=5 // pred_check_branch
        %289 = sbr.rel (%p286) target = $region56
      $region55: #{tpu_custom_call.1} parent=5 // pred_region
        %s290 = ssub.s32 %s15, 1
        %p291 = scmp.lt.s32.totalorder %s20, 1
        %s292 = scalar_select %p291, %s20, 1
        %s293 = scalar_lea.vmem %s0, %s292
        %p294 = pneg %p41
        %p295 = pneg %p38
        %p296 = pneg %p62
        %p297 = pneg %p59
        %p298 = pneg %p83
        %p299 = pneg %p80
        %p300 = pneg %p104
        %p301 = pneg %p101
        %p302 = pneg %p125
        %p303 = pneg %p122
        %p304 = pneg %p146
        %p305 = pneg %p143
        %p306 = pneg %p167
        %p307 = pneg %p164
        %p308 = pneg %p188
        %p309 = pneg %p185
        %p310 = pneg %p209
        %p311 = pneg %p206
        %p312 = pneg %p235
        %p313 = pneg %p232
        %s314 = sand.u32 %s222, 1
        %s315 = sand.u32 %s222, 1
        %s316 = smul.addr %s315, 128
        %s317 = scalar_lea.vmem [#allocation2], %s316
        %p318 = scmp.lt.s32.totalorder %s20, 1
        %s319 = scalar_select %p318, %s20, 1
        %s320 = scalar_lea.vmem %s0, %s319
        %s321 = smul.u32 16, %s20
        %s322 = ssub.s32 25, %s321
        %p323 = scmp.lt.s32.totalorder %s322, 16
        %s324 = scalar_select %p323, %s322, 16
        %s325 = smul.u32 128, %s324
        %v326 = vld [vmem:[%s320] sm:$0x1]
        %v327 = vld [vmem:[%s1] sm:$0xff]
        %v328 = vld [vmem:[%s1 + $0x8] sm:$0x3]
        %330 = vset.pattern.permute.xlu0 0
        %331 = vperm.xlu0 %330, %v327
        %v332 = vpop.permute.xlu0 %331
        %335 = vset.pattern.permute.xlu0 0
        %336 = vperm.xlu0 %335, %v328
        %v337 = vpop.permute.xlu0 %336
        %v340 = vlaneseq
        %v341 = vshrl.u32 %v340, 7
        %v342 = vsub.s32 0, %v341
        %v343 = vrot.slane %v326, %v342
        %v345 = vmul.f32 %v332, %v343
        %v346 = vmul.f32 %v337, %v343
        %v347 = vld [vmem:[%s2] sm:$0xff]
        %v348 = vld [vmem:[%s2 + $0x8] sm:$0x3]
        %350 = vset.pattern.permute.xlu0 0
        %351 = vperm.xlu0 %350, %v347
        %v352 = vpop.permute.xlu0 %351
        %355 = vset.pattern.permute.xlu0 0
        %356 = vperm.xlu0 %355, %v348
        %v357 = vpop.permute.xlu0 %356
        %v359 = vadd.f32 %v345, %v352
        %v360 = vadd.f32 %v346, %v357
        %v361 = vtanh.pop %v359
        %v362 = vtanh.pop %v360
        %v363 = vld [vmem:[%s3] sm:$0xff]
        %v364 = vld [vmem:[%s3 + $0x8] sm:$0x3]
        %v365 = vld [vmem:[%s4] sm:$0xff]
        %v366 = vld [vmem:[%s4 + $0x8] sm:$0x3]
        %368 = vset.pattern.permute.xlu0 0
        %369 = vperm.xlu0 %368, %v365
        %v370 = vpop.permute.xlu0 %369
        %373 = vset.pattern.permute.xlu0 0
        %374 = vperm.xlu0 %373, %v366
        %v375 = vpop.permute.xlu0 %374
        %vm377 = vcmask 80896
        %v379 = vsel %vm377, %v363, 0
        %v382 = vsel %vm377, %v364, 0
        %vm384 = vcmask 1041408
        %v386 = vsel %vm384, %v362, 0
        %388 = vmatprep.subr.mxu0 0.0
        %389 = vmatpush1.msra.mxu0 %v361
        %390 = vmatprep.subr.mxu0 0.0
        %391 = vmatpush1.msra.mxu0 %v386
        %392 = vmatprep.subr.mxu0 0.0
        %393 = vmatpush1.msra.mxu0 0.0
        %394 = vmatprep.subr.mxu0 0.0
        %395 = vmatpush1.msra.mxu0 0.0
        %396 = vmatprep.subr.mxu0 0.0
        %397 = vmatpush1.msra.mxu0 0.0
        %398 = vmatprep.subr.mxu0 0.0
        %399 = vmatpush1.msra.mxu0 0.0
        %400 = vmatprep.subr.mxu0 0.0
        %401 = vmatpush1.msra.mxu0 0.0
        %402 = vmatprep.subr.mxu0 0.0
        %403 = vmatpush1.msra.mxu0 0.0
        %404 = vmatprep.subr.mxu0 0.0
        %405 = vmatpush1.msra.mxu0 0.0
        %406 = vmatprep.subr.mxu0 0.0
        %407 = vmatpush1.msra.mxu0 0.0
        %408 = vmatprep.subr.mxu0 0.0
        %409 = vmatpush1.msra.mxu0 0.0
        %410 = vmatprep.subr.mxu0 0.0
        %411 = vmatpush1.msra.mxu0 0.0
        %412 = vmatprep.subr.mxu0 0.0
        %413 = vmatpush1.msra.mxu0 0.0
        %414 = vmatprep.subr.mxu0 0.0
        %415 = vmatpush1.msra.mxu0 0.0
        %416 = vmatprep.subr.mxu0 0.0
        %417 = vmatpush1.msra.mxu0 0.0
        %418 = vmatprep.subr.mxu0 0.0
        %419 = vmatpush1.msra.mxu0 0.0
        %420 = vmatprep.subr.mxu0 0.0
        %421 = vmatpush1.msra.mxu0 0.0
        %422 = vmatprep.subr.mxu0 0.0
        %423 = vmatpush1.msra.mxu0 0.0
        %424 = vmatprep.subr.mxu0 0.0
        %425 = vmatpush1.msra.mxu0 0.0
        %426 = vmatprep.subr.mxu0 0.0
        %427 = vmatpush1.msra.mxu0 0.0
        %428 = vmatprep.subr.mxu0 0.0
        %429 = vmatpush1.msra.mxu0 0.0
        %430 = vmatprep.subr.mxu0 0.0
        %431 = vmatpush1.msra.mxu0 0.0
        %432 = vmatprep.subr.mxu0 0.0
        %433 = vmatpush1.msra.mxu0 0.0
        %434 = vmatprep.subr.mxu0 0.0
        %435 = vmatpush1.msra.mxu0 0.0
        %436 = vmatprep.subr.mxu0 0.0
        %437 = vmatpush1.msra.mxu0 0.0
        %438 = vmatprep.subr.mxu0 0.0
        %439 = vmatpush1.msra.mxu0 0.0
        %440 = vmatprep.subr.mxu0 0.0
        %441 = vmatpush1.msra.mxu0 0.0
        %442 = vmatprep.subr.mxu0 0.0
        %443 = vmatpush1.msra.mxu0 0.0
        %444 = vmatprep.subr.mxu0 0.0
        %445 = vmatpush1.msra.mxu0 0.0
        %446 = vmatprep.subr.mxu0 0.0
        %447 = vmatpush1.msra.mxu0 0.0
        %448 = vmatprep.subr.mxu0 0.0
        %449 = vmatpush1.msra.mxu0 0.0
        %450 = vmatprep.subr.mxu0 0.0
        %451 = vmatpush1.msra.mxu0 0.0
        %452 = vmatprep.mubr.f32.mxu0 0.0
        %453 = vmatmul.mubr.f32.gmra.mrb[0].mxu0 %v379
        %v454 = vpop.f32.mrb[0].mxu0
        %v455 = vadd.f32 %v370, %v454
        %v456 = vpop.f32.mrb[0].mxu0
        %457 = vmatprep.mubr.f32.mxu0 0.0
        %458 = vmatmul.mubr.f32.gmra.mrb[0].mxu0 %v382
        %v459 = vpop.f32.mrb[0].mxu0
        %v460 = vadd.f32 %v375, %v459
        %v461 = vpop.f32.mrb[0].mxu0
        %462 = vdwg.mxu0
        %v463 = vtanh.pop %v455
        %v464 = vtanh.pop %v460
        %v465 = vld [vmem:[%s5] sm:$0xff]
        %v466 = vld [vmem:[%s6] sm:$0xff]
        %468 = vset.pattern.permute.xlu0 0
        %469 = vperm.xlu0 %468, %v466
        %v470 = vpop.permute.xlu0 %469
        %v473 = vsel %vm377, %v465, 0
        %v476 = vsel %vm384, %v464, 0
        %478 = vmatprep.subr.mxu0 0.0
        %479 = vmatpush1.msra.mxu0 %v463
        %480 = vmatprep.subr.mxu0 0.0
        %481 = vmatpush1.msra.mxu0 %v476
        %482 = vmatprep.subr.mxu0 0.0
        %483 = vmatpush1.msra.mxu0 0.0
        %484 = vmatprep.subr.mxu0 0.0
        %485 = vmatpush1.msra.mxu0 0.0
        %486 = vmatprep.subr.mxu0 0.0
        %487 = vmatpush1.msra.mxu0 0.0
        %488 = vmatprep.subr.mxu0 0.0
        %489 = vmatpush1.msra.mxu0 0.0
        %490 = vmatprep.subr.mxu0 0.0
        %491 = vmatpush1.msra.mxu0 0.0
        %492 = vmatprep.subr.mxu0 0.0
        %493 = vmatpush1.msra.mxu0 0.0
        %494 = vmatprep.subr.mxu0 0.0
        %495 = vmatpush1.msra.mxu0 0.0
        %496 = vmatprep.subr.mxu0 0.0
        %497 = vmatpush1.msra.mxu0 0.0
        %498 = vmatprep.subr.mxu0 0.0
        %499 = vmatpush1.msra.mxu0 0.0
        %500 = vmatprep.subr.mxu0 0.0
        %501 = vmatpush1.msra.mxu0 0.0
        %502 = vmatprep.subr.mxu0 0.0
        %503 = vmatpush1.msra.mxu0 0.0
        %504 = vmatprep.subr.mxu0 0.0
        %505 = vmatpush1.msra.mxu0 0.0
        %506 = vmatprep.subr.mxu0 0.0
        %507 = vmatpush1.msra.mxu0 0.0
        %508 = vmatprep.subr.mxu0 0.0
        %509 = vmatpush1.msra.mxu0 0.0
        %510 = vmatprep.subr.mxu0 0.0
        %511 = vmatpush1.msra.mxu0 0.0
        %512 = vmatprep.subr.mxu0 0.0
        %513 = vmatpush1.msra.mxu0 0.0
        %514 = vmatprep.subr.mxu0 0.0
        %515 = vmatpush1.msra.mxu0 0.0
        %516 = vmatprep.subr.mxu0 0.0
        %517 = vmatpush1.msra.mxu0 0.0
        %518 = vmatprep.subr.mxu0 0.0
        %519 = vmatpush1.msra.mxu0 0.0
        %520 = vmatprep.subr.mxu0 0.0
        %521 = vmatpush1.msra.mxu0 0.0
        %522 = vmatprep.subr.mxu0 0.0
        %523 = vmatpush1.msra.mxu0 0.0
        %524 = vmatprep.subr.mxu0 0.0
        %525 = vmatpush1.msra.mxu0 0.0
        %526 = vmatprep.subr.mxu0 0.0
        %527 = vmatpush1.msra.mxu0 0.0
        %528 = vmatprep.subr.mxu0 0.0
        %529 = vmatpush1.msra.mxu0 0.0
        %530 = vmatprep.subr.mxu0 0.0
        %531 = vmatpush1.msra.mxu0 0.0
        %532 = vmatprep.subr.mxu0 0.0
        %533 = vmatpush1.msra.mxu0 0.0
        %534 = vmatprep.subr.mxu0 0.0
        %535 = vmatpush1.msra.mxu0 0.0
        %536 = vmatprep.subr.mxu0 0.0
        %537 = vmatpush1.msra.mxu0 0.0
        %538 = vmatprep.subr.mxu0 0.0
        %539 = vmatpush1.msra.mxu0 0.0
        %540 = vmatprep.subr.mxu0 0.0
        %541 = vmatpush1.msra.mxu0 0.0
        %542 = vmatprep.mubr.f32.mxu0 0.0
        %543 = vmatmul.mubr.f32.gmra.mrb[0].mxu0 %v473
        %v544 = vpop.f32.mrb[0].mxu0
        %v545 = vadd.f32 %v470, %v544
        %v546 = vpop.f32.mrb[0].mxu0
        %547 = vdwg.mxu0
        %v548 = vtanh.pop %v545
        %v549 = vld [vmem:[%s7] sm:$0xff]
        %551 = vset.pattern.permute.xlu0 0
        %552 = vperm.xlu0 %551, %v549
        %v553 = vpop.permute.xlu0 %552
        %v555 = vmul.f32 %v548, %v553
        %v556 = vld [vmem:[%s8] sm:$0xff]
        %558 = vset.pattern.permute.xlu0 0
        %559 = vperm.xlu0 %558, %v556
        %v560 = vpop.permute.xlu0 %559
        %v562 = vadd.f32 %v555, %v560
        %563 = vxpose.xlu0.b32.start [1/16] %v562, 128
        %564 = vxpose.xlu0.b32.cont [2/16] 0.0, 128
        %565 = vxpose.xlu0.b32.cont [3/16] 0.0, 128
        %566 = vxpose.xlu0.b32.cont [4/16] 0.0, 128
        %567 = vxpose.xlu0.b32.cont [5/16] 0.0, 128
        %568 = vxpose.xlu0.b32.cont [6/16] 0.0, 128
        %569 = vxpose.xlu0.b32.cont [7/16] 0.0, 128
        %570 = vxpose.xlu0.b32.cont [8/16] 0.0, 128
        %571 = vxpose.xlu0.b32.cont [9/16] 0.0, 128
        %572 = vxpose.xlu0.b32.cont [10/16] 0.0, 128
        %573 = vxpose.xlu0.b32.cont [11/16] 0.0, 128
        %574 = vxpose.xlu0.b32.cont [12/16] 0.0, 128
        %575 = vxpose.xlu0.b32.cont [13/16] 0.0, 128
        %576 = vxpose.xlu0.b32.cont [14/16] 0.0, 128
        %577 = vxpose.xlu0.b32.cont [15/16] 0.0, 128
        %578 = vxpose.xlu0.b32.end [16/16] 0.0, 128
        %v579 = vpop.trf.xlu0
        %v580 = vpop.trf.xlu0
        %v581 = vpop.trf.xlu0
        %v582 = vpop.trf.xlu0
        %v583 = vpop.trf.xlu0
        %v584 = vpop.trf.xlu0
        %v585 = vpop.trf.xlu0
        %v586 = vpop.trf.xlu0
        %v587 = vpop.trf.xlu0
        %v588 = vpop.trf.xlu0
        %v589 = vpop.trf.xlu0
        %v590 = vpop.trf.xlu0
        %v591 = vpop.trf.xlu0
        %v592 = vpop.trf.xlu0
        %v593 = vpop.trf.xlu0
        %v594 = vpop.trf.xlu0
        %vm595 = vcmask 64512
        %596 = vst.msk [vmem:[%s317] sm:$0xff] %vm595, %v579
        %597 = vst.msk [vmem:[%s317 + $0x8] sm:$0xff] %vm595, %v580
        %598 = vst.msk [vmem:[%s317 + $0x10] sm:$0xff] %vm595, %v581
        %599 = vst.msk [vmem:[%s317 + $0x18] sm:$0xff] %vm595, %v582
        %600 = vst.msk [vmem:[%s317 + $0x20] sm:$0xff] %vm595, %v583
        %601 = vst.msk [vmem:[%s317 + $0x28] sm:$0xff] %vm595, %v584
        %602 = vst.msk [vmem:[%s317 + $0x30] sm:$0xff] %vm595, %v585
        %603 = vst.msk [vmem:[%s317 + $0x38] sm:$0xff] %vm595, %v586
        %604 = vst.msk [vmem:[%s317 + $0x40] sm:$0xff] %vm595, %v587
        %605 = vst.msk [vmem:[%s317 + $0x48] sm:$0xff] %vm595, %v588
        %606 = vst.msk [vmem:[%s317 + $0x50] sm:$0xff] %vm595, %v589
        %607 = vst.msk [vmem:[%s317 + $0x58] sm:$0xff] %vm595, %v590
        %608 = vst.msk [vmem:[%s317 + $0x60] sm:$0xff] %vm595, %v591
        %609 = vst.msk [vmem:[%s317 + $0x68] sm:$0xff] %vm595, %v592
        %610 = vst.msk [vmem:[%s317 + $0x70] sm:$0xff] %vm595, %v593
        %611 = vst.msk [vmem:[%s317 + $0x78] sm:$0xff] %vm595, %v594
        %s612 = sand.u32 %s222, 1
        %s613 = sand.u32 %s222, 1
        %s614 = smul.addr %s613, 128
        %s615 = scalar_lea.vmem [#allocation2], %s614
        // Predicated region
        $region57: #{tpu_custom_call.1} parent=55 // pred_check
          %p616 = pneg %p232
        $region58: #{tpu_custom_call.1} parent=55 // pred_check_branch
          %618 = sbr.rel (%p616) target = $region60
        $region59: #{tpu_custom_call.1} parent=55 // pred_region
          %s619 = smul.u32 16, %s20
          %s620 = ssub.s32 25, %s619
          %p621 = scmp.lt.s32.totalorder %s620, 16
          %s622 = scalar_select %p621, %s620, 16
          %s623 = smul.u32 128, %s622
          %p624 = scmp.ne.s32.totalorder 0, %s623
          %s625 = smul.addr %s619, 8
          %s626 = scalar_lea.vmem %s9, %s625
          // Predicated region
          $region61: #{tpu_custom_call.1} parent=59 // pred_check
            %p627 = pneg %p624
          $region62: #{tpu_custom_call.1} parent=59 // pred_check_branch
            %629 = sbr.rel (%p627) target = $region64
          $region63: #{tpu_custom_call.1} parent=59 // pred_region
            // Predicated region
            $region65: #{tpu_custom_call.1} parent=63 // pred_check
              _
            $region66: #{tpu_custom_call.1} parent=63 // pred_check_branch
              %631 = sbr.rel (0) target = $region68
            $region67: #{tpu_custom_call.1} parent=63 // pred_region
              // Predicated region
              $region87: #{tpu_custom_call.1} parent=67 // pred_check
                _
              $region88: #{tpu_custom_call.1} parent=67 // pred_check_branch
                %710 = sbr.rel (0) target = $region90
              $region89: #{tpu_custom_call.1} parent=67 // pred_region
                %s711 = sshrl.u32 %s622, 4
                // While loop
                $region91: #{tpu_custom_call.1} parent=89 // loop_pre_header
                  _
                $region92: #{tpu_custom_call.1} parent=89 // loop_header
                  %s713 = sphi 0, %s715
                  %p714 = scmp.ge.s32.totalorder %s713, %s711
                  %s718 = sphi 0, %s755
                  %s719 = sphi %s615, %s758
                  %s720 = sphi %s626, %s759
                $region93: #{tpu_custom_call.1} parent=89 // loop_header_branch
                  %717 = sbr.rel (%p714) target = $region97
                $region94: #{tpu_custom_call.1} parent=89 // loop_body
                  %v721 = vld [vmem:[%s719] sm:$0xff]
                  %722 = vst [vmem:[%s720] sm:$0xff] %v721
                  %v723 = vld [vmem:[%s719 + $0x8] sm:$0xff]
                  %724 = vst [vmem:[%s720 + $0x8] sm:$0xff] %v723
                  %v725 = vld [vmem:[%s719 + $0x10] sm:$0xff]
                  %726 = vst [vmem:[%s720 + $0x10] sm:$0xff] %v725
                  %v727 = vld [vmem:[%s719 + $0x18] sm:$0xff]
                  %728 = vst [vmem:[%s720 + $0x18] sm:$0xff] %v727
                  %v729 = vld [vmem:[%s719 + $0x20] sm:$0xff]
                  %730 = vst [vmem:[%s720 + $0x20] sm:$0xff] %v729
                  %v731 = vld [vmem:[%s719 + $0x28] sm:$0xff]
                  %732 = vst [vmem:[%s720 + $0x28] sm:$0xff] %v731
                  %v733 = vld [vmem:[%s719 + $0x30] sm:$0xff]
                  %734 = vst [vmem:[%s720 + $0x30] sm:$0xff] %v733
                  %v735 = vld [vmem:[%s719 + $0x38] sm:$0xff]
                  %736 = vst [vmem:[%s720 + $0x38] sm:$0xff] %v735
                  %v737 = vld [vmem:[%s719 + $0x40] sm:$0xff]
                  %738 = vst [vmem:[%s720 + $0x40] sm:$0xff] %v737
                  %v739 = vld [vmem:[%s719 + $0x48] sm:$0xff]
                  %740 = vst [vmem:[%s720 + $0x48] sm:$0xff] %v739
                  %v741 = vld [vmem:[%s719 + $0x50] sm:$0xff]
                  %742 = vst [vmem:[%s720 + $0x50] sm:$0xff] %v741
                  %v743 = vld [vmem:[%s719 + $0x58] sm:$0xff]
                  %744 = vst [vmem:[%s720 + $0x58] sm:$0xff] %v743
                  %v745 = vld [vmem:[%s719 + $0x60] sm:$0xff]
                  %746 = vst [vmem:[%s720 + $0x60] sm:$0xff] %v745
                  %v747 = vld [vmem:[%s719 + $0x68] sm:$0xff]
                  %748 = vst [vmem:[%s720 + $0x68] sm:$0xff] %v747
                  %v749 = vld [vmem:[%s719 + $0x70] sm:$0xff]
                  %750 = vst [vmem:[%s720 + $0x70] sm:$0xff] %v749
                  %v751 = vld [vmem:[%s719 + $0x78] sm:$0xff]
                  %752 = vst [vmem:[%s720 + $0x78] sm:$0xff] %v751
                  %s753 = sadd.s32 1, %s718
                  %p754 = scmp.ge.s32.totalorder %s753, %s711
                  %s755 = scalar_select %p754, 0, %s753
                  %s756 = smul.u32 %s755, 128
                  %s757 = smul.u32 %s755, 128
                  %s758 = scalar_lea.vmem %s615, %s756 [#allocation2]
                  %s759 = scalar_lea.vmem %s626, %s757
                $region95: #{tpu_custom_call.1} parent=89 // loop_footer
                  %s715 = sadd.s32 %s713, 1
                $region96: #{tpu_custom_call.1} parent=89 // loop_footer_branch
                  %712 = sbr.rel target = $region92
                $region97: #{tpu_custom_call.1} parent=89 // loop_exit
                  _
                %s760 = sshrl.u32 %s622, 4
                %s761 = sand.u32 %s622, 15
                %s762 = smul.u32 %s760, 16
                %s763 = smul.u32 8, %s762
                %s764 = scalar_lea.vmem %s615, %s763 [#allocation2]
                %s765 = smul.u32 8, %s762
                %s766 = scalar_lea.vmem %s626, %s765
                // While loop
                $region98: #{tpu_custom_call.1} parent=89 // loop_pre_header
                  _
                $region99: #{tpu_custom_call.1} parent=89 // loop_header
                  %s768 = sphi 0, %s770
                  %p769 = scmp.ge.s32.totalorder %s768, %s761
                  %s773 = sphi 0, %s780
                  %s774 = sphi %s764, %s783
                  %s775 = sphi %s766, %s784
                $region100: #{tpu_custom_call.1} parent=89 // loop_header_branch
                  %772 = sbr.rel (%p769) target = $region104
                $region101: #{tpu_custom_call.1} parent=89 // loop_body
                  %v776 = vld [vmem:[%s774] sm:$0xff]
                  %777 = vst [vmem:[%s775] sm:$0xff] %v776
                  %s778 = sadd.s32 1, %s773
                  %p779 = scmp.ge.s32.totalorder %s778, %s761
                  %s780 = scalar_select %p779, 0, %s778
                  %s781 = smul.u32 %s780, 8
                  %s782 = smul.u32 %s780, 8
                  %s783 = scalar_lea.vmem %s764, %s781 [#allocation2]
                  %s784 = scalar_lea.vmem %s766, %s782
                $region102: #{tpu_custom_call.1} parent=89 // loop_footer
                  %s770 = sadd.s32 %s768, 1
                $region103: #{tpu_custom_call.1} parent=89 // loop_footer_branch
                  %767 = sbr.rel target = $region99
                $region104: #{tpu_custom_call.1} parent=89 // loop_exit
                  _
              $region90: #{tpu_custom_call.1} parent=67 // pred_fallthru
                _
              // Predicated region
              $region105: #{tpu_custom_call.1} parent=67 // pred_check
                _
              $region106: #{tpu_custom_call.1} parent=67 // pred_check_branch
                %786 = sbr.rel target = $region108
              $region107: #{tpu_custom_call.1} parent=67 // pred_region
                _
              $region108: #{tpu_custom_call.1} parent=67 // pred_fallthru
                _
            $region68: #{tpu_custom_call.1} parent=63 // pred_fallthru
              _
            // Predicated region
            $region69: #{tpu_custom_call.1} parent=63 // pred_check
              _
            $region70: #{tpu_custom_call.1} parent=63 // pred_check_branch
              %633 = sbr.rel target = $region72
            $region71: #{tpu_custom_call.1} parent=63 // pred_region
              %s635 = sshrl.u32 %s622, 4
              // While loop
              $region73: #{tpu_custom_call.1} parent=71 // loop_pre_header
                _
              $region74: #{tpu_custom_call.1} parent=71 // loop_header
                %s637 = sphi 0, %s639
                %p638 = scmp.ge.s32.totalorder %s637, %s635
                %s642 = sphi 0, %s679
                %s643 = sphi %s615, %s682
                %s644 = sphi %s626, %s683
              $region75: #{tpu_custom_call.1} parent=71 // loop_header_branch
                %641 = sbr.rel (%p638) target = $region79
              $region76: #{tpu_custom_call.1} parent=71 // loop_body
                %v645 = vld [vmem:[%s643] sm:$0xff]
                %646 = vst [vmem:[%s644] sm:$0xff] %v645
                %v647 = vld [vmem:[%s643 + $0x8] sm:$0xff]
                %648 = vst [vmem:[%s644 + $0x8] sm:$0xff] %v647
                %v649 = vld [vmem:[%s643 + $0x10] sm:$0xff]
                %650 = vst [vmem:[%s644 + $0x10] sm:$0xff] %v649
                %v651 = vld [vmem:[%s643 + $0x18] sm:$0xff]
                %652 = vst [vmem:[%s644 + $0x18] sm:$0xff] %v651
                %v653 = vld [vmem:[%s643 + $0x20] sm:$0xff]
                %654 = vst [vmem:[%s644 + $0x20] sm:$0xff] %v653
                %v655 = vld [vmem:[%s643 + $0x28] sm:$0xff]
                %656 = vst [vmem:[%s644 + $0x28] sm:$0xff] %v655
                %v657 = vld [vmem:[%s643 + $0x30] sm:$0xff]
                %658 = vst [vmem:[%s644 + $0x30] sm:$0xff] %v657
                %v659 = vld [vmem:[%s643 + $0x38] sm:$0xff]
                %660 = vst [vmem:[%s644 + $0x38] sm:$0xff] %v659
                %v661 = vld [vmem:[%s643 + $0x40] sm:$0xff]
                %662 = vst [vmem:[%s644 + $0x40] sm:$0xff] %v661
                %v663 = vld [vmem:[%s643 + $0x48] sm:$0xff]
                %664 = vst [vmem:[%s644 + $0x48] sm:$0xff] %v663
                %v665 = vld [vmem:[%s643 + $0x50] sm:$0xff]
                %666 = vst [vmem:[%s644 + $0x50] sm:$0xff] %v665
                %v667 = vld [vmem:[%s643 + $0x58] sm:$0xff]
                %668 = vst [vmem:[%s644 + $0x58] sm:$0xff] %v667
                %v669 = vld [vmem:[%s643 + $0x60] sm:$0xff]
                %670 = vst [vmem:[%s644 + $0x60] sm:$0xff] %v669
                %v671 = vld [vmem:[%s643 + $0x68] sm:$0xff]
                %672 = vst [vmem:[%s644 + $0x68] sm:$0xff] %v671
                %v673 = vld [vmem:[%s643 + $0x70] sm:$0xff]
                %674 = vst [vmem:[%s644 + $0x70] sm:$0xff] %v673
                %v675 = vld [vmem:[%s643 + $0x78] sm:$0xff]
                %676 = vst [vmem:[%s644 + $0x78] sm:$0xff] %v675
                %s677 = sadd.s32 1, %s642
                %p678 = scmp.ge.s32.totalorder %s677, %s635
                %s679 = scalar_select %p678, 0, %s677
                %s680 = smul.u32 %s679, 128
                %s681 = smul.u32 %s679, 128
                %s682 = scalar_lea.vmem %s615, %s680 [#allocation2]
                %s683 = scalar_lea.vmem %s626, %s681
              $region77: #{tpu_custom_call.1} parent=71 // loop_footer
                %s639 = sadd.s32 %s637, 1
              $region78: #{tpu_custom_call.1} parent=71 // loop_footer_branch
                %636 = sbr.rel target = $region74
              $region79: #{tpu_custom_call.1} parent=71 // loop_exit
                _
              %s684 = sshrl.u32 %s622, 4
              %s685 = sand.u32 %s622, 15
              %s686 = smul.u32 %s684, 16
              %s687 = smul.u32 8, %s686
              %s688 = scalar_lea.vmem %s615, %s687 [#allocation2]
              %s689 = smul.u32 8, %s686
              %s690 = scalar_lea.vmem %s626, %s689
              // While loop
              $region80: #{tpu_custom_call.1} parent=71 // loop_pre_header
                _
              $region81: #{tpu_custom_call.1} parent=71 // loop_header
                %s692 = sphi 0, %s694
                %p693 = scmp.ge.s32.totalorder %s692, %s685
                %s697 = sphi 0, %s704
                %s698 = sphi %s688, %s707
                %s699 = sphi %s690, %s708
              $region82: #{tpu_custom_call.1} parent=71 // loop_header_branch
                %696 = sbr.rel (%p693) target = $region86
              $region83: #{tpu_custom_call.1} parent=71 // loop_body
                %v700 = vld [vmem:[%s698] sm:$0xff]
                %701 = vst [vmem:[%s699] sm:$0xff] %v700
                %s702 = sadd.s32 1, %s697
                %p703 = scmp.ge.s32.totalorder %s702, %s685
                %s704 = scalar_select %p703, 0, %s702
                %s705 = smul.u32 %s704, 8
                %s706 = smul.u32 %s704, 8
                %s707 = scalar_lea.vmem %s688, %s705 [#allocation2]
                %s708 = scalar_lea.vmem %s690, %s706
              $region84: #{tpu_custom_call.1} parent=71 // loop_footer
                %s694 = sadd.s32 %s692, 1
              $region85: #{tpu_custom_call.1} parent=71 // loop_footer_branch
                %691 = sbr.rel target = $region81
              $region86: #{tpu_custom_call.1} parent=71 // loop_exit
                _
            $region72: #{tpu_custom_call.1} parent=63 // pred_fallthru
              _
          $region64: #{tpu_custom_call.1} parent=59 // pred_fallthru
            _
          %787 = vnop
        $region60: #{tpu_custom_call.1} parent=55 // pred_fallthru
          _
      $region56: #{tpu_custom_call.1} parent=5 // pred_fallthru
        _
      %p788 = scmp.le.s32.totalorder 2, %s15
      // Predicated region
      $region109: #{tpu_custom_call.1} parent=5 // pred_check
        %p789 = pneg %p788
      $region110: #{tpu_custom_call.1} parent=5 // pred_check_branch
        %791 = sbr.rel (%p789) target = $region112
      $region111: #{tpu_custom_call.1} parent=5 // pred_region
        %s792 = ssub.s32 %s15, 2
        // Predicated region
        $region113: #{tpu_custom_call.1} parent=111 // pred_check
          %p793 = pneg %p238
        $region114: #{tpu_custom_call.1} parent=111 // pred_check_branch
          %795 = sbr.rel (%p793) target = $region116
        $region115: #{tpu_custom_call.1} parent=111 // pred_region
          %s796 = sand.u32 %s223, 1
          %s797 = sand.u32 %s223, 1
          %s798 = smul.addr %s797, 128
          %s799 = scalar_lea.vmem [#allocation2], %s798
        $region116: #{tpu_custom_call.1} parent=111 // pred_fallthru
          _
      $region112: #{tpu_custom_call.1} parent=5 // pred_fallthru
        _
    $region6: #{tpu_custom_call.1} parent=1 // loop_footer
      %s19 = sadd.s32 1, %s15
    $region7: #{tpu_custom_call.1} parent=1 // loop_footer_branch
      %14 = sbr.rel target = $region3
    $region8: #{tpu_custom_call.1} parent=1 // loop_exit
      _

// kernel: tpu_custom_call.1
$region0: #{tpu_custom_call.1}
  #allocation0 [shape = 'u32[]', space=smem, size = 0x4, offset = 0x4, fixed_abs, tag = 'smem constant byte address 0x4 - core index']
  #allocation1 [shape = 'u32[144,128]{1,0:T(1,128)}', space=vmem, size = 0x12000, scoped, tag = 'internal scratch']
  %s0 = inlined_call_operand.vmem [shape: f32[1,200], index: 0, kind: input, shape index: {}]
  %s1 = inlined_call_operand.vmem [shape: f32[10,1], index: 1, kind: input, shape index: {}]
  %s2 = inlined_call_operand.vmem [shape: f32[10,1], index: 2, kind: input, shape index: {}]
  %s3 = inlined_call_operand.vmem [shape: f32[10,10], index: 3, kind: input, shape index: {}]
  %s4 = inlined_call_operand.vmem [shape: f32[10,1], index: 4, kind: input, shape index: {}]
  %s5 = inlined_call_operand.vmem [shape: f32[8,10], index: 5, kind: input, shape index: {}]
  %s6 = inlined_call_operand.vmem [shape: f32[8,1], index: 6, kind: input, shape index: {}]
  %s7 = inlined_call_operand.vmem [shape: f32[8,1], index: 7, kind: input, shape index: {}]
  %s8 = inlined_call_operand.vmem [shape: f32[8,1], index: 8, kind: input, shape index: {}]
  %s9 = inlined_call_operand.hbm [shape: f32[8,200], index: 9, kind: output, shape index: {}]
  %s10 = sld [smem:[#allocation0]]
  $region69: #{tpu_custom_call.1} parent=0
    _
  %s12 = ssub.s32 1, %s10
  %s13 = scalar_select 0, %s12, %s10
  $region1: #{tpu_custom_call.1} parent=0
    #allocation2 [shape = 'u8[8192]{0}', space=vmem, size = 0x2000, scoped, tag = 'output window, operand 0']
    #allocation3 [shape = 's32[2]{0}', space=sflag, size = 0x8, scoped, tag = 'scoped memory for tpu_custom_call.1']
    %14 = vsyncpa [#allocation3], 0
    %s15 = scalar_lea.sflag [#allocation3], 1
    %16 = vsyncpa %s15, 0
    loop: start=0, step=1, limit=4
    $region2: #{tpu_custom_call.1} parent=1 // loop_pre_header
      _
    $region3: #{tpu_custom_call.1} parent=1 // loop_header
      %s18 = sphi 0, %s22
      %p19 = scmp.ge.s32.totalorder %s18, 4
      %s28 = sphi 0, %s30
      %s31 = sphi 0, %s28
      %s32 = sphi 0, %s31
      %s48 = sphi 0, %s32
      %s52 = sphi 0, %s52
      %s54 = sphi 0, %s52
      %s55 = sphi 0, %s54
      %s69 = sphi 0, %s55
      %s73 = sphi 0, %s73
      %s75 = sphi 0, %s73
      %s76 = sphi 0, %s75
      %s90 = sphi 0, %s76
      %s94 = sphi 0, %s94
      %s96 = sphi 0, %s94
      %s97 = sphi 0, %s96
      %s111 = sphi 0, %s97
      %s115 = sphi 0, %s115
      %s117 = sphi 0, %s115
      %s118 = sphi 0, %s117
      %s132 = sphi 0, %s118
      %s136 = sphi 0, %s136
      %s138 = sphi 0, %s136
      %s139 = sphi 0, %s138
      %s153 = sphi 0, %s139
      %s157 = sphi 0, %s157
      %s159 = sphi 0, %s157
      %s160 = sphi 0, %s159
      %s174 = sphi 0, %s160
      %s178 = sphi 0, %s178
      %s180 = sphi 0, %s178
      %s181 = sphi 0, %s180
      %s195 = sphi 0, %s181
      %s199 = sphi 0, %s199
      %s201 = sphi 0, %s199
      %s202 = sphi 0, %s201
      %s216 = sphi 0, %s202
      %s222 = sphi 0, %s224
      %s225 = sphi 0, %s222
      %s226 = sphi 0, %s225
      %s242 = sphi 0, %s226
    $region4: #{tpu_custom_call.1} parent=1 // loop_header_branch
      %21 = sbr.rel (%p19) target = $region8
    $region5: #{tpu_custom_call.1} parent=1 // loop_body
      %s23 = ssub.s32 %s18, 1
      %s24 = ssub.s32 %s18, 2
      %s25 = sadd.s32 %s18, 1
      %s26 = ssub.s32 %s18, %s25
      %p27 = scmp.eq.s32.totalorder %s26, 0
      %s29 = sadd.s32 %s28, 1
      %s30 = scalar_select %p27, %s28, %s29
      %p33 = pneg %p27
      %p34 = scmp.eq.s32.totalorder %s18, 1
      %p35 = por %p33, %p34
      %p36 = scmp.ne.s32.totalorder %s28, %s31
      %p37 = scmp.eq.s32.totalorder %s18, 0
      %p38 = por %p36, %p37
      %p39 = scmp.ne.s32.totalorder %s28, %s31
      %p40 = scmp.eq.s32.totalorder %s23, 1
      %p41 = por %p39, %p40
      %p42 = scmp.ne.s32.totalorder %s31, %s32
      %p43 = scmp.eq.s32.totalorder %s23, 0
      %p44 = por %p42, %p43
      %p45 = scmp.ne.s32.totalorder %s31, %s32
      %p46 = scmp.eq.s32.totalorder %s24, 1
      %p47 = por %p45, %p46
      %p49 = scmp.ne.s32.totalorder %s32, %s48
      %p50 = scmp.eq.s32.totalorder %s24, 0
      %p51 = por %p49, %p50
      %s53 = sadd.s32 %s52, 1
      %p56 = scmp.eq.s32.totalorder %s18, 1
      %p57 = scmp.ne.s32.totalorder %s52, %s54
      %p58 = scmp.eq.s32.totalorder %s18, 0
      %p59 = por %p57, %p58
      %p60 = scmp.ne.s32.totalorder %s52, %s54
      %p61 = scmp.eq.s32.totalorder %s23, 1
      %p62 = por %p60, %p61
      %p63 = scmp.ne.s32.totalorder %s54, %s55
      %p64 = scmp.eq.s32.totalorder %s23, 0
      %p65 = por %p63, %p64
      %p66 = scmp.ne.s32.totalorder %s54, %s55
      %p67 = scmp.eq.s32.totalorder %s24, 1
      %p68 = por %p66, %p67
      %p70 = scmp.ne.s32.totalorder %s55, %s69
      %p71 = scmp.eq.s32.totalorder %s24, 0
      %p72 = por %p70, %p71
      %s74 = sadd.s32 %s73, 1
      %p77 = scmp.eq.s32.totalorder %s18, 1
      %p78 = scmp.ne.s32.totalorder %s73, %s75
      %p79 = scmp.eq.s32.totalorder %s18, 0
      %p80 = por %p78, %p79
      %p81 = scmp.ne.s32.totalorder %s73, %s75
      %p82 = scmp.eq.s32.totalorder %s23, 1
      %p83 = por %p81, %p82
      %p84 = scmp.ne.s32.totalorder %s75, %s76
      %p85 = scmp.eq.s32.totalorder %s23, 0
      %p86 = por %p84, %p85
      %p87 = scmp.ne.s32.totalorder %s75, %s76
      %p88 = scmp.eq.s32.totalorder %s24, 1
      %p89 = por %p87, %p88
      %p91 = scmp.ne.s32.totalorder %s76, %s90
      %p92 = scmp.eq.s32.totalorder %s24, 0
      %p93 = por %p91, %p92
      %s95 = sadd.s32 %s94, 1
      %p98 = scmp.eq.s32.totalorder %s18, 1
      %p99 = scmp.ne.s32.totalorder %s94, %s96
      %p100 = scmp.eq.s32.totalorder %s18, 0
      %p101 = por %p99, %p100
      %p102 = scmp.ne.s32.totalorder %s94, %s96
      %p103 = scmp.eq.s32.totalorder %s23, 1
      %p104 = por %p102, %p103
      %p105 = scmp.ne.s32.totalorder %s96, %s97
      %p106 = scmp.eq.s32.totalorder %s23, 0
      %p107 = por %p105, %p106
      %p108 = scmp.ne.s32.totalorder %s96, %s97
      %p109 = scmp.eq.s32.totalorder %s24, 1
      %p110 = por %p108, %p109
      %p112 = scmp.ne.s32.totalorder %s97, %s111
      %p113 = scmp.eq.s32.totalorder %s24, 0
      %p114 = por %p112, %p113
      %s116 = sadd.s32 %s115, 1
      %p119 = scmp.eq.s32.totalorder %s18, 1
      %p120 = scmp.ne.s32.totalorder %s115, %s117
      %p121 = scmp.eq.s32.totalorder %s18, 0
      %p122 = por %p120, %p121
      %p123 = scmp.ne.s32.totalorder %s115, %s117
      %p124 = scmp.eq.s32.totalorder %s23, 1
      %p125 = por %p123, %p124
      %p126 = scmp.ne.s32.totalorder %s117, %s118
      %p127 = scmp.eq.s32.totalorder %s23, 0
      %p128 = por %p126, %p127
      %p129 = scmp.ne.s32.totalorder %s117, %s118
      %p130 = scmp.eq.s32.totalorder %s24, 1
      %p131 = por %p129, %p130
      %p133 = scmp.ne.s32.totalorder %s118, %s132
      %p134 = scmp.eq.s32.totalorder %s24, 0
      %p135 = por %p133, %p134
      %s137 = sadd.s32 %s136, 1
      %p140 = scmp.eq.s32.totalorder %s18, 1
      %p141 = scmp.ne.s32.totalorder %s136, %s138
      %p142 = scmp.eq.s32.totalorder %s18, 0
      %p143 = por %p141, %p142
      %p144 = scmp.ne.s32.totalorder %s136, %s138
      %p145 = scmp.eq.s32.totalorder %s23, 1
      %p146 = por %p144, %p145
      %p147 = scmp.ne.s32.totalorder %s138, %s139
      %p148 = scmp.eq.s32.totalorder %s23, 0
      %p149 = por %p147, %p148
      %p150 = scmp.ne.s32.totalorder %s138, %s139
      %p151 = scmp.eq.s32.totalorder %s24, 1
      %p152 = por %p150, %p151
      %p154 = scmp.ne.s32.totalorder %s139, %s153
      %p155 = scmp.eq.s32.totalorder %s24, 0
      %p156 = por %p154, %p155
      %s158 = sadd.s32 %s157, 1
      %p161 = scmp.eq.s32.totalorder %s18, 1
      %p162 = scmp.ne.s32.totalorder %s157, %s159
      %p163 = scmp.eq.s32.totalorder %s18, 0
      %p164 = por %p162, %p163
      %p165 = scmp.ne.s32.totalorder %s157, %s159
      %p166 = scmp.eq.s32.totalorder %s23, 1
      %p167 = por %p165, %p166
      %p168 = scmp.ne.s32.totalorder %s159, %s160
      %p169 = scmp.eq.s32.totalorder %s23, 0
      %p170 = por %p168, %p169
      %p171 = scmp.ne.s32.totalorder %s159, %s160
      %p172 = scmp.eq.s32.totalorder %s24, 1
      %p173 = por %p171, %p172
      %p175 = scmp.ne.s32.totalorder %s160, %s174
      %p176 = scmp.eq.s32.totalorder %s24, 0
      %p177 = por %p175, %p176
      %s179 = sadd.s32 %s178, 1
      %p182 = scmp.eq.s32.totalorder %s18, 1
      %p183 = scmp.ne.s32.totalorder %s178, %s180
      %p184 = scmp.eq.s32.totalorder %s18, 0
      %p185 = por %p183, %p184
      %p186 = scmp.ne.s32.totalorder %s178, %s180
      %p187 = scmp.eq.s32.totalorder %s23, 1
      %p188 = por %p186, %p187
      %p189 = scmp.ne.s32.totalorder %s180, %s181
      %p190 = scmp.eq.s32.totalorder %s23, 0
      %p191 = por %p189, %p190
      %p192 = scmp.ne.s32.totalorder %s180, %s181
      %p193 = scmp.eq.s32.totalorder %s24, 1
      %p194 = por %p192, %p193
      %p196 = scmp.ne.s32.totalorder %s181, %s195
      %p197 = scmp.eq.s32.totalorder %s24, 0
      %p198 = por %p196, %p197
      %s200 = sadd.s32 %s199, 1
      %p203 = scmp.eq.s32.totalorder %s18, 1
      %p204 = scmp.ne.s32.totalorder %s199, %s201
      %p205 = scmp.eq.s32.totalorder %s18, 0
      %p206 = por %p204, %p205
      %p207 = scmp.ne.s32.totalorder %s199, %s201
      %p208 = scmp.eq.s32.totalorder %s23, 1
      %p209 = por %p207, %p208
      %p210 = scmp.ne.s32.totalorder %s201, %s202
      %p211 = scmp.eq.s32.totalorder %s23, 0
      %p212 = por %p210, %p211
      %p213 = scmp.ne.s32.totalorder %s201, %s202
      %p214 = scmp.eq.s32.totalorder %s24, 1
      %p215 = por %p213, %p214
      %p217 = scmp.ne.s32.totalorder %s202, %s216
      %p218 = scmp.eq.s32.totalorder %s24, 0
      %p219 = por %p217, %p218
      %s220 = ssub.s32 %s18, %s25
      %p221 = scmp.eq.s32.totalorder %s220, 0
      %s223 = sadd.s32 %s222, 1
      %s224 = scalar_select %p221, %s222, %s223
      %p227 = pneg %p221
      %p228 = scmp.eq.s32.totalorder %s18, 1
      %p229 = por %p227, %p228
      %p230 = scmp.ne.s32.totalorder %s222, %s225
      %p231 = scmp.eq.s32.totalorder %s18, 0
      %p232 = por %p230, %p231
      %p233 = scmp.ne.s32.totalorder %s222, %s225
      %p234 = scmp.eq.s32.totalorder %s23, 1
      %p235 = por %p233, %p234
      %p236 = scmp.ne.s32.totalorder %s225, %s226
      %p237 = scmp.eq.s32.totalorder %s23, 0
      %p238 = por %p236, %p237
      %p239 = scmp.ne.s32.totalorder %s225, %s226
      %p240 = scmp.eq.s32.totalorder %s24, 1
      %p241 = por %p239, %p240
      %p243 = scmp.ne.s32.totalorder %s226, %s242
      %p244 = scmp.eq.s32.totalorder %s24, 0
      %p245 = por %p243, %p244
      %p246 = scmp.le.s32.totalorder 1, %s18
      %p247 = scmp.lt.s32.totalorder %s18, 3
      %p248 = pnand %p246, %p247
      %p249 = pneg %p248
      // Predicated region
      $region9: #{tpu_custom_call.1} parent=5 // pred_check
        _
      $region10: #{tpu_custom_call.1} parent=5 // pred_check_branch
        %251 = sbr.rel (%p248) target = $region12
      $region11: #{tpu_custom_call.1} parent=5 // pred_region
        %s252 = ssub.s32 %s18, 1
        // Predicated region
        $region13: #{tpu_custom_call.1} parent=11 // pred_check
          %p253 = pneg %p65
        $region14: #{tpu_custom_call.1} parent=11 // pred_check_branch
          %255 = sbr.rel (%p253) target = $region16
        $region15: #{tpu_custom_call.1} parent=11 // pred_region
          _
        $region16: #{tpu_custom_call.1} parent=11 // pred_fallthru
          _
        // Predicated region
        $region17: #{tpu_custom_call.1} parent=11 // pred_check
          %p256 = pneg %p86
        $region18: #{tpu_custom_call.1} parent=11 // pred_check_branch
          %258 = sbr.rel (%p256) target = $region20
        $region19: #{tpu_custom_call.1} parent=11 // pred_region
          _
        $region20: #{tpu_custom_call.1} parent=11 // pred_fallthru
          _
        // Predicated region
        $region21: #{tpu_custom_call.1} parent=11 // pred_check
          %p259 = pneg %p107
        $region22: #{tpu_custom_call.1} parent=11 // pred_check_branch
          %261 = sbr.rel (%p259) target = $region24
        $region23: #{tpu_custom_call.1} parent=11 // pred_region
          _
        $region24: #{tpu_custom_call.1} parent=11 // pred_fallthru
          _
        // Predicated region
        $region25: #{tpu_custom_call.1} parent=11 // pred_check
          %p262 = pneg %p128
        $region26: #{tpu_custom_call.1} parent=11 // pred_check_branch
          %264 = sbr.rel (%p262) target = $region28
        $region27: #{tpu_custom_call.1} parent=11 // pred_region
          _
        $region28: #{tpu_custom_call.1} parent=11 // pred_fallthru
          _
        // Predicated region
        $region29: #{tpu_custom_call.1} parent=11 // pred_check
          %p265 = pneg %p149
        $region30: #{tpu_custom_call.1} parent=11 // pred_check_branch
          %267 = sbr.rel (%p265) target = $region32
        $region31: #{tpu_custom_call.1} parent=11 // pred_region
          _
        $region32: #{tpu_custom_call.1} parent=11 // pred_fallthru
          _
        // Predicated region
        $region33: #{tpu_custom_call.1} parent=11 // pred_check
          %p268 = pneg %p170
        $region34: #{tpu_custom_call.1} parent=11 // pred_check_branch
          %270 = sbr.rel (%p268) target = $region36
        $region35: #{tpu_custom_call.1} parent=11 // pred_region
          _
        $region36: #{tpu_custom_call.1} parent=11 // pred_fallthru
          _
        // Predicated region
        $region37: #{tpu_custom_call.1} parent=11 // pred_check
          %p271 = pneg %p191
        $region38: #{tpu_custom_call.1} parent=11 // pred_check_branch
          %273 = sbr.rel (%p271) target = $region40
        $region39: #{tpu_custom_call.1} parent=11 // pred_region
          _
        $region40: #{tpu_custom_call.1} parent=11 // pred_fallthru
          _
        // Predicated region
        $region41: #{tpu_custom_call.1} parent=11 // pred_check
          %p274 = pneg %p212
        $region42: #{tpu_custom_call.1} parent=11 // pred_check_branch
          %276 = sbr.rel (%p274) target = $region44
        $region43: #{tpu_custom_call.1} parent=11 // pred_region
          _
        $region44: #{tpu_custom_call.1} parent=11 // pred_fallthru
          _
      $region12: #{tpu_custom_call.1} parent=5 // pred_fallthru
        _
      %p277 = scmp.lt.s32.totalorder %s18, 2
      // Predicated region
      $region45: #{tpu_custom_call.1} parent=5 // pred_check
        %p278 = pneg %p277
      $region46: #{tpu_custom_call.1} parent=5 // pred_check_branch
        %280 = sbr.rel (%p278) target = $region48
      $region47: #{tpu_custom_call.1} parent=5 // pred_region
        // Predicated region
        $region49: #{tpu_custom_call.1} parent=47 // pred_check
          %p281 = pneg %p38
        $region50: #{tpu_custom_call.1} parent=47 // pred_check_branch
          %283 = sbr.rel (%p281) target = $region52
        $region51: #{tpu_custom_call.1} parent=47 // pred_region
          %p284 = scmp.lt.s32.totalorder %s18, 1
          %s285 = scalar_select %p284, %s18, 1
          %s286 = scalar_lea.vmem %s0, %s285
        $region52: #{tpu_custom_call.1} parent=47 // pred_fallthru
          _
      $region48: #{tpu_custom_call.1} parent=5 // pred_fallthru
        _
      %p287 = scmp.le.s32.totalorder 1, %s18
      %p288 = scmp.lt.s32.totalorder %s18, 3
      %p289 = pnand %p287, %p288
      %p290 = pneg %p289
      // Predicated region
      $region53: #{tpu_custom_call.1} parent=5 // pred_check
        _
      $region54: #{tpu_custom_call.1} parent=5 // pred_check_branch
        %292 = sbr.rel (%p289) target = $region56
      $region55: #{tpu_custom_call.1} parent=5 // pred_region
        %s293 = ssub.s32 %s18, 1
        %p294 = scmp.lt.s32.totalorder %s23, 1
        %s295 = scalar_select %p294, %s23, 1
        %s296 = scalar_lea.vmem %s0, %s295
        %p297 = pneg %p44
        %p298 = pneg %p41
        %p299 = pneg %p65
        %p300 = pneg %p62
        %p301 = pneg %p86
        %p302 = pneg %p83
        %p303 = pneg %p107
        %p304 = pneg %p104
        %p305 = pneg %p128
        %p306 = pneg %p125
        %p307 = pneg %p149
        %p308 = pneg %p146
        %p309 = pneg %p170
        %p310 = pneg %p167
        %p311 = pneg %p191
        %p312 = pneg %p188
        %p313 = pneg %p212
        %p314 = pneg %p209
        %p315 = pneg %p238
        %p316 = pneg %p235
        %s317 = sand.u32 %s225, 1
        %s318 = scalar_lea.sflag [#allocation3], %s317
        %s319 = sand.u32 %s225, 1
        %s320 = smul.addr %s319, 8
        %s321 = scalar_lea.vmem [#allocation2], %s320
        %p322 = scmp.lt.s32.totalorder %s23, 1
        %s323 = scalar_select %p322, %s23, 1
        %s324 = scalar_lea.vmem %s0, %s323
        %v325 = vld [vmem:[%s324] sm:$0x1]
        %v326 = vld [vmem:[%s1] sm:$0xff]
        %v327 = vld [vmem:[%s1 + $0x8] sm:$0x3]
        %329 = vset.pattern.permute.xlu0 0
        %330 = vperm.xlu0 %329, %v326
        %v331 = vpop.permute.xlu0 %330
        %334 = vset.pattern.permute.xlu0 0
        %335 = vperm.xlu0 %334, %v327
        %v336 = vpop.permute.xlu0 %335
        %v339 = vlaneseq
        %v340 = vshrl.u32 %v339, 7
        %v341 = vsub.s32 0, %v340
        %v342 = vrot.slane %v325, %v341
        %v344 = vmul.f32 %v331, %v342
        %v345 = vmul.f32 %v336, %v342
        %v346 = vld [vmem:[%s2] sm:$0xff]
        %v347 = vld [vmem:[%s2 + $0x8] sm:$0x3]
        %349 = vset.pattern.permute.xlu0 0
        %350 = vperm.xlu0 %349, %v346
        %v351 = vpop.permute.xlu0 %350
        %354 = vset.pattern.permute.xlu0 0
        %355 = vperm.xlu0 %354, %v347
        %v356 = vpop.permute.xlu0 %355
        %v358 = vadd.f32 %v344, %v351
        %v359 = vadd.f32 %v345, %v356
        %v360 = vtanh.pop %v358
        %v361 = vtanh.pop %v359
        %v362 = vld [vmem:[%s3] sm:$0xff]
        %v363 = vld [vmem:[%s3 + $0x8] sm:$0x3]
        %v364 = vld [vmem:[%s4] sm:$0xff]
        %v365 = vld [vmem:[%s4 + $0x8] sm:$0x3]
        %367 = vset.pattern.permute.xlu0 0
        %368 = vperm.xlu0 %367, %v364
        %v369 = vpop.permute.xlu0 %368
        %372 = vset.pattern.permute.xlu0 0
        %373 = vperm.xlu0 %372, %v365
        %v374 = vpop.permute.xlu0 %373
        %vm376 = vcmask 80896
        %v378 = vsel %vm376, %v362, 0
        %v381 = vsel %vm376, %v363, 0
        %vm383 = vcmask 1041408
        %v385 = vsel %vm383, %v361, 0
        %387 = vmatprep.subr.mxu0 0.0
        %388 = vmatpush1.msra.mxu0 %v360
        %389 = vmatprep.subr.mxu0 0.0
        %390 = vmatpush1.msra.mxu0 %v385
        %391 = vmatprep.subr.mxu0 0.0
        %392 = vmatpush1.msra.mxu0 0.0
        %393 = vmatprep.subr.mxu0 0.0
        %394 = vmatpush1.msra.mxu0 0.0
        %395 = vmatprep.subr.mxu0 0.0
        %396 = vmatpush1.msra.mxu0 0.0
        %397 = vmatprep.subr.mxu0 0.0
        %398 = vmatpush1.msra.mxu0 0.0
        %399 = vmatprep.subr.mxu0 0.0
        %400 = vmatpush1.msra.mxu0 0.0
        %401 = vmatprep.subr.mxu0 0.0
        %402 = vmatpush1.msra.mxu0 0.0
        %403 = vmatprep.subr.mxu0 0.0
        %404 = vmatpush1.msra.mxu0 0.0
        %405 = vmatprep.subr.mxu0 0.0
        %406 = vmatpush1.msra.mxu0 0.0
        %407 = vmatprep.subr.mxu0 0.0
        %408 = vmatpush1.msra.mxu0 0.0
        %409 = vmatprep.subr.mxu0 0.0
        %410 = vmatpush1.msra.mxu0 0.0
        %411 = vmatprep.subr.mxu0 0.0
        %412 = vmatpush1.msra.mxu0 0.0
        %413 = vmatprep.subr.mxu0 0.0
        %414 = vmatpush1.msra.mxu0 0.0
        %415 = vmatprep.subr.mxu0 0.0
        %416 = vmatpush1.msra.mxu0 0.0
        %417 = vmatprep.subr.mxu0 0.0
        %418 = vmatpush1.msra.mxu0 0.0
        %419 = vmatprep.subr.mxu0 0.0
        %420 = vmatpush1.msra.mxu0 0.0
        %421 = vmatprep.subr.mxu0 0.0
        %422 = vmatpush1.msra.mxu0 0.0
        %423 = vmatprep.subr.mxu0 0.0
        %424 = vmatpush1.msra.mxu0 0.0
        %425 = vmatprep.subr.mxu0 0.0
        %426 = vmatpush1.msra.mxu0 0.0
        %427 = vmatprep.subr.mxu0 0.0
        %428 = vmatpush1.msra.mxu0 0.0
        %429 = vmatprep.subr.mxu0 0.0
        %430 = vmatpush1.msra.mxu0 0.0
        %431 = vmatprep.subr.mxu0 0.0
        %432 = vmatpush1.msra.mxu0 0.0
        %433 = vmatprep.subr.mxu0 0.0
        %434 = vmatpush1.msra.mxu0 0.0
        %435 = vmatprep.subr.mxu0 0.0
        %436 = vmatpush1.msra.mxu0 0.0
        %437 = vmatprep.subr.mxu0 0.0
        %438 = vmatpush1.msra.mxu0 0.0
        %439 = vmatprep.subr.mxu0 0.0
        %440 = vmatpush1.msra.mxu0 0.0
        %441 = vmatprep.subr.mxu0 0.0
        %442 = vmatpush1.msra.mxu0 0.0
        %443 = vmatprep.subr.mxu0 0.0
        %444 = vmatpush1.msra.mxu0 0.0
        %445 = vmatprep.subr.mxu0 0.0
        %446 = vmatpush1.msra.mxu0 0.0
        %447 = vmatprep.subr.mxu0 0.0
        %448 = vmatpush1.msra.mxu0 0.0
        %449 = vmatprep.subr.mxu0 0.0
        %450 = vmatpush1.msra.mxu0 0.0
        %451 = vmatprep.mubr.f32.mxu0 0.0
        %452 = vmatmul.mubr.f32.gmra.mrb[0].mxu0 %v378
        %v453 = vpop.f32.mrb[0].mxu0
        %v454 = vadd.f32 %v369, %v453
        %v455 = vpop.f32.mrb[0].mxu0
        %456 = vmatprep.mubr.f32.mxu0 0.0
        %457 = vmatmul.mubr.f32.gmra.mrb[0].mxu0 %v381
        %v458 = vpop.f32.mrb[0].mxu0
        %v459 = vadd.f32 %v374, %v458
        %v460 = vpop.f32.mrb[0].mxu0
        %461 = vdwg.mxu0
        %v462 = vtanh.pop %v454
        %v463 = vtanh.pop %v459
        %v464 = vld [vmem:[%s5] sm:$0xff]
        %v465 = vld [vmem:[%s6] sm:$0xff]
        %467 = vset.pattern.permute.xlu0 0
        %468 = vperm.xlu0 %467, %v465
        %v469 = vpop.permute.xlu0 %468
        %v472 = vsel %vm376, %v464, 0
        %v475 = vsel %vm383, %v463, 0
        %477 = vmatprep.subr.mxu0 0.0
        %478 = vmatpush1.msra.mxu0 %v462
        %479 = vmatprep.subr.mxu0 0.0
        %480 = vmatpush1.msra.mxu0 %v475
        %481 = vmatprep.subr.mxu0 0.0
        %482 = vmatpush1.msra.mxu0 0.0
        %483 = vmatprep.subr.mxu0 0.0
        %484 = vmatpush1.msra.mxu0 0.0
        %485 = vmatprep.subr.mxu0 0.0
        %486 = vmatpush1.msra.mxu0 0.0
        %487 = vmatprep.subr.mxu0 0.0
        %488 = vmatpush1.msra.mxu0 0.0
        %489 = vmatprep.subr.mxu0 0.0
        %490 = vmatpush1.msra.mxu0 0.0
        %491 = vmatprep.subr.mxu0 0.0
        %492 = vmatpush1.msra.mxu0 0.0
        %493 = vmatprep.subr.mxu0 0.0
        %494 = vmatpush1.msra.mxu0 0.0
        %495 = vmatprep.subr.mxu0 0.0
        %496 = vmatpush1.msra.mxu0 0.0
        %497 = vmatprep.subr.mxu0 0.0
        %498 = vmatpush1.msra.mxu0 0.0
        %499 = vmatprep.subr.mxu0 0.0
        %500 = vmatpush1.msra.mxu0 0.0
        %501 = vmatprep.subr.mxu0 0.0
        %502 = vmatpush1.msra.mxu0 0.0
        %503 = vmatprep.subr.mxu0 0.0
        %504 = vmatpush1.msra.mxu0 0.0
        %505 = vmatprep.subr.mxu0 0.0
        %506 = vmatpush1.msra.mxu0 0.0
        %507 = vmatprep.subr.mxu0 0.0
        %508 = vmatpush1.msra.mxu0 0.0
        %509 = vmatprep.subr.mxu0 0.0
        %510 = vmatpush1.msra.mxu0 0.0
        %511 = vmatprep.subr.mxu0 0.0
        %512 = vmatpush1.msra.mxu0 0.0
        %513 = vmatprep.subr.mxu0 0.0
        %514 = vmatpush1.msra.mxu0 0.0
        %515 = vmatprep.subr.mxu0 0.0
        %516 = vmatpush1.msra.mxu0 0.0
        %517 = vmatprep.subr.mxu0 0.0
        %518 = vmatpush1.msra.mxu0 0.0
        %519 = vmatprep.subr.mxu0 0.0
        %520 = vmatpush1.msra.mxu0 0.0
        %521 = vmatprep.subr.mxu0 0.0
        %522 = vmatpush1.msra.mxu0 0.0
        %523 = vmatprep.subr.mxu0 0.0
        %524 = vmatpush1.msra.mxu0 0.0
        %525 = vmatprep.subr.mxu0 0.0
        %526 = vmatpush1.msra.mxu0 0.0
        %527 = vmatprep.subr.mxu0 0.0
        %528 = vmatpush1.msra.mxu0 0.0
        %529 = vmatprep.subr.mxu0 0.0
        %530 = vmatpush1.msra.mxu0 0.0
        %531 = vmatprep.subr.mxu0 0.0
        %532 = vmatpush1.msra.mxu0 0.0
        %533 = vmatprep.subr.mxu0 0.0
        %534 = vmatpush1.msra.mxu0 0.0
        %535 = vmatprep.subr.mxu0 0.0
        %536 = vmatpush1.msra.mxu0 0.0
        %537 = vmatprep.subr.mxu0 0.0
        %538 = vmatpush1.msra.mxu0 0.0
        %539 = vmatprep.subr.mxu0 0.0
        %540 = vmatpush1.msra.mxu0 0.0
        %541 = vmatprep.mubr.f32.mxu0 0.0
        %542 = vmatmul.mubr.f32.gmra.mrb[0].mxu0 %v472
        %v543 = vpop.f32.mrb[0].mxu0
        %v544 = vadd.f32 %v469, %v543
        %v545 = vpop.f32.mrb[0].mxu0
        %546 = vdwg.mxu0
        %v547 = vtanh.pop %v544
        %v548 = vld [vmem:[%s7] sm:$0xff]
        %550 = vset.pattern.permute.xlu0 0
        %551 = vperm.xlu0 %550, %v548
        %v552 = vpop.permute.xlu0 %551
        %v554 = vmul.f32 %v547, %v552
        %v555 = vld [vmem:[%s8] sm:$0xff]
        %557 = vset.pattern.permute.xlu0 0
        %558 = vperm.xlu0 %557, %v555
        %v559 = vpop.permute.xlu0 %558
        %v561 = vadd.f32 %v554, %v559
        %562 = vst [vmem:[%s321] sm:$0xff] %v561
        %s563 = sand.u32 %s225, 1
        %s564 = scalar_lea.sflag [#allocation3], %s563
        %s565 = sand.u32 %s225, 1
        %s566 = smul.addr %s565, 8
        %s567 = scalar_lea.vmem [#allocation2], %s566
        // Predicated region
        $region57: #{tpu_custom_call.1} parent=55 // pred_check
          %p568 = pneg %p235
        $region58: #{tpu_custom_call.1} parent=55 // pred_check_branch
          %570 = sbr.rel (%p568) target = $region60
        $region59: #{tpu_custom_call.1} parent=55 // pred_region
          %s572 = ssub.s32 128, 128
          %573 = vsyncadd %s564, %s572
          %s574 = smul.addr %s23, 128
          %s575 = scalar_lea.hbm %s9, %s574
          %s577 = sshll.u32 %s567, 4
          %s578 = int_to_ptr.vmem [resolvable:$true] %s577
          %580 = dma.vmem_to_hbm [thread:$0]  %s578, 128, %s575, %s564
        $region60: #{tpu_custom_call.1} parent=55 // pred_fallthru
          _
      $region56: #{tpu_custom_call.1} parent=5 // pred_fallthru
        _
      %p581 = scmp.le.s32.totalorder 2, %s18
      // Predicated region
      $region61: #{tpu_custom_call.1} parent=5 // pred_check
        %p582 = pneg %p581
      $region62: #{tpu_custom_call.1} parent=5 // pred_check_branch
        %584 = sbr.rel (%p582) target = $region64
      $region63: #{tpu_custom_call.1} parent=5 // pred_region
        %s585 = ssub.s32 %s18, 2
        // Predicated region
        $region65: #{tpu_custom_call.1} parent=63 // pred_check
          %p586 = pneg %p241
        $region66: #{tpu_custom_call.1} parent=63 // pred_check_branch
          %588 = sbr.rel (%p586) target = $region68
        $region67: #{tpu_custom_call.1} parent=63 // pred_region
          %s589 = sand.u32 %s226, 1
          %s590 = scalar_lea.sflag [#allocation3], %s589
          %s591 = sand.u32 %s226, 1
          %s592 = smul.addr %s591, 8
          %s593 = scalar_lea.vmem [#allocation2], %s592
          %594 = dma.done %s590, 128
        $region68: #{tpu_custom_call.1} parent=63 // pred_fallthru
          _
      $region64: #{tpu_custom_call.1} parent=5 // pred_fallthru
        _
    $region6: #{tpu_custom_call.1} parent=1 // loop_footer
      %s22 = sadd.s32 1, %s18
    $region7: #{tpu_custom_call.1} parent=1 // loop_footer_branch
      %17 = sbr.rel target = $region3
    $region8: #{tpu_custom_call.1} parent=1 // loop_exit
      _
    %595 = vsyncpa [#allocation3], 1
    %s596 = scalar_lea.sflag [#allocation3], 1
    %597 = vsyncpa %s596, 1

</llo_original>
